<compile_context>
chip_gen: v6e
topology: v6e:2x2x1
jax: 0.10.0
libtpu: 0.0.40
codegen_flags: <defaults>
</compile_context>

<pallas_src>
import functools

import jax
import jax.numpy as jnp
from jax import lax
from jax.experimental import pallas as pl
from jax.experimental.pallas import tpu as pltpu


def _sep_u_kernel(*refs, num_blocks, beta):
    """Fused SEP_U.forward for one 128-lane feature block.

    Ref order (L = num_blocks):
      x0                      [N0, Db]        feature block (f32)
      A_0..A_L                [M, N_l]        fwd adjacency, bf16, resident
      dinv_0..dinv_L          [M, 1]          1/clamp(rowsum(A_l),1), f32
      spow_0..spow_L          [N_l, 1]        clamp(colsum(A_l),1)^norm_2, f32
      S_0..S_{L-1}            [N_{l+1}, N_l]  assignment, bf16, resident
      pinv_0..pinv_{L-1}      [N_{l+1}, 1]    1/clamp(rowsum(S_l),1), f32
      uinv_0..uinv_{L-1}      [N_l, 1]        1/clamp(colsum(S_l),1), f32
      h_src_out [N0, Db], h_dst_out [M, Db]
      skip_0..skip_{L-1}      [N_l, Db]       VMEM scratch for skip connections
    """
    L = num_blocks
    f32, bf16 = jnp.float32, jnp.bfloat16

    idx = 0
    x0_ref = refs[idx]; idx += 1
    a_refs = refs[idx:idx + L + 1]; idx += L + 1
    dinv_refs = refs[idx:idx + L + 1]; idx += L + 1
    spow_refs = refs[idx:idx + L + 1]; idx += L + 1
    s_refs = refs[idx:idx + L]; idx += L
    pinv_refs = refs[idx:idx + L]; idx += L
    uinv_refs = refs[idx:idx + L]; idx += L
    hsrc_ref = refs[idx]
    hdst_ref = refs[idx + 1]
    skip_refs = refs[idx + 2: idx + 2 + L]

    def hgcn(l, x):
        # forward etype: mean over incoming src neighbours of each dst node
        a = a_refs[l][...]                                   # bf16 [M, N_l]
        rst = jnp.dot(a, x.astype(bf16),
                      preferred_element_type=f32)            # [M, Db]
        rst = rst * dinv_refs[l][...]                        # f32 scale (precomputed)
        # back etype == reverse(forward): bsrc = n_src^norm_2 * (A^T @ rst)
        bsrc = lax.dot_general(a, rst.astype(bf16), (((0,), (0,)), ((), ())),
                               preferred_element_type=f32)   # [N_l, Db]
        bsrc = bsrc * spow_refs[l][...]
        return bsrc, rst

    def sep_down(l, x):
        # ('node','nc','comm'): mean-pool node features into communities + ReLU
        r = jnp.dot(s_refs[l][...], x.astype(bf16),
                    preferred_element_type=f32)              # [N_{l+1}, Db]
        return jnp.maximum(r * pinv_refs[l][...], 0.0)

    def sep_up(l, x):
        # ('comm','cn','node'): scatter community features back to nodes + ReLU
        r = lax.dot_general(s_refs[l][...], x.astype(bf16),
                            (((0,), (0,)), ((), ())),
                            preferred_element_type=f32)      # [N_l, Db]
        return jnp.maximum(r * uinv_refs[l][...], 0.0)

    x = x0_ref[...].astype(f32)

    # ---- down path: HGCN -> pool -------------------------------------------
    for l in range(L):
        h_src, _h_dst = hgcn(l, x)
        skip_refs[l][...] = h_src                            # skip in VMEM scratch
        x = sep_down(l, h_src)

    # ---- up path: HGCN -> unpool -> + beta * skip ---------------------------
    for l in range(L, 0, -1):
        h_src, _h_dst = hgcn(l, x)
        h_src = sep_up(l - 1, h_src)
        x = h_src + beta * skip_refs[l - 1][...]

    # ---- final HGCN ----------------------------------------------------------
    h_src, h_dst = hgcn(0, x)
    hsrc_ref[...] = h_src.astype(hsrc_ref.dtype)
    hdst_ref[...] = h_dst.astype(hdst_ref.dtype)


def sep_u_forward(g_adjs, g_comm_assigns, h0, etype_forward, etype_back,
                  norm_2=-1.0, *, beta, d_block=128):
    """Mirror of SEP_U.forward(g_list, g_comm_list, h0, etype_fwd, etype_back, norm_2).

    g_adjs         : list of L+1 dense forward adjacencies A_l [M, N_l] (dst x src)
    g_comm_assigns : list of L community assignments       S_l [N_{l+1}, N_l]
    h0             : dict with h0[src_type] = [N0, D] (and dst+'_edge', unused)
    """
    L = len(g_comm_assigns)
    assert len(g_adjs) == L + 1
    src_type, _, dst_type = etype_forward
    del etype_back  # assumed to be the exact reverse of etype_forward
    x0 = jnp.asarray(h0[src_type], jnp.float32)
    _ = h0[dst_type + "_edge"]  # interface fidelity; unused (alpha=0)

    n0, d = x0.shape
    m = g_adjs[0].shape[0]
    if d % d_block != 0:
        d_block = d  # TODO(synk): pad the feature dim instead for odd widths
    n_db = d // d_block

    # ---- host-side precompute: degree norms + bf16 0/1 masks ----------------
    a_bf, dinv, spow = [], [], []
    for a in g_adjs:
        a = jnp.asarray(a, jnp.float32)
        dinv.append(1.0 / jnp.maximum(a.sum(-1, keepdims=True), 1.0))       # [M,1]
        spow.append((jnp.maximum(a.sum(0), 1.0) ** norm_2)[:, None])        # [N,1]
        a_bf.append(a.astype(jnp.bfloat16))
    s_bf, pinv, uinv = [], [], []
    for s in g_comm_assigns:
        s = jnp.asarray(s, jnp.float32)
        pinv.append(1.0 / jnp.maximum(s.sum(-1, keepdims=True), 1.0))       # [Nc,1]
        uinv.append((1.0 / jnp.maximum(s.sum(0), 1.0))[:, None])            # [Nn,1]
        s_bf.append(s.astype(jnp.bfloat16))

    resident_ops = (*a_bf, *dinv, *spow, *s_bf, *pinv, *uinv)
    operands = (x0, *resident_ops)

    # ---- specs: feature dim blocked (parallel grid), graph tensors resident --
    in_specs = [pl.BlockSpec((n0, d_block), lambda j: (0, j))]
    for op in resident_ops:
        in_specs.append(pl.BlockSpec(op.shape, lambda j: (0, 0)))
    out_specs = (pl.BlockSpec((n0, d_block), lambda j: (0, j)),
                 pl.BlockSpec((m, d_block), lambda j: (0, j)))
    scratch_shapes = [pltpu.VMEM((g_comm_assigns[l].shape[1], d_block),
                                 jnp.float32) for l in range(L)]

    # ---- explicit VMEM budget (v7x has only 64 MiB physical VMEM) -----------
    def _nbytes(x):
        return int(x.size) * x.dtype.itemsize
    resident_bytes = sum(_nbytes(op) for op in resident_ops)
    blocked_bytes = (n0 * d_block + n0 * d_block + m * d_block) * 4
    scratch_bytes = sum(g_comm_assigns[l].shape[1] * d_block * 4 for l in range(L))
    est = resident_bytes + 2 * blocked_bytes + scratch_bytes + (2 << 20)
    vmem_limit = int(min(max(est, 16 << 20), 48 << 20))

    kernel = functools.partial(_sep_u_kernel, num_blocks=L, beta=float(beta))
    h_src, h_dst = pl.pallas_call(
        kernel,
        out_shape=(jax.ShapeDtypeStruct((n0, d), jnp.float32),
                   jax.ShapeDtypeStruct((m, d), jnp.float32)),
        grid=(n_db,),
        in_specs=in_specs,
        out_specs=out_specs,
        scratch_shapes=scratch_shapes,
        compiler_params=pltpu.CompilerParams(
            dimension_semantics=("parallel",),   # v7x: feeds the 2nd TensorCore
            vmem_limit_bytes=vmem_limit),
    )(*operands)
    return h_src, h_dst


if __name__ == "__main__":
    key = jax.random.PRNGKey(0)
    ks = jax.random.split(key, 12)

    embed_size = 256       # 2 lane-dense feature blocks of 128 -> 2 parallel grid steps
    beta = 0.3
    norm_2 = -1.0
    num_blocks = 2

    # node counts per level of the hierarchy (all multiples of 8 for sublanes)
    n_src = (48, 24, 16)   # level-0 src nodes, then community counts per level
    n_dst = 40             # dst ("*_edge") nodes, same at every level

    etype_forward = ("node", "ne", "item")
    etype_back = ("item", "en", "node")

    h0 = {
        "node": jax.random.normal(ks[0], (n_src[0], embed_size), jnp.float32),
        "item_edge": jnp.zeros((n_dst, embed_size), jnp.float32),  # unused (alpha=0)
    }

    # dense forward adjacencies A_l : [n_dst, n_src[l]], 0/1
    adjs = []
    for l in range(num_blocks + 1):
        a = jax.random.uniform(ks[1 + l], (n_dst, n_src[l])) < 0.3
        adjs.append(a.astype(jnp.float32))

    # community assignments S_l : [n_src[l+1], n_src[l]] (one community per node)
    assigns = []
    for l in range(num_blocks):
        cid = jax.random.randint(ks[5 + l], (n_src[l],), 0, n_src[l + 1])
        assigns.append(jax.nn.one_hot(cid, n_src[l + 1], dtype=jnp.float32).T)

    h_src, h_dst = sep_u_forward(adjs, assigns, h0, etype_forward, etype_back,
                                 norm_2, beta=beta)
    jax.block_until_ready((h_src, h_dst))

    # ---- pure-JAX f32 reference of SEP_U.forward for a correctness check ----
    def ref_hgcn(a, x):
        deg_dst = jnp.maximum(a.sum(-1, keepdims=True), 1.0)
        rst = (a @ x) / deg_dst
        deg_src = jnp.maximum(a.sum(0, keepdims=True), 1.0)
        bsrc = (a * deg_src ** norm_2).T @ rst
        return bsrc, rst

    def ref_sep(s, x):  # mean-pool + ReLU (SEP uses its default norm_2 = -1)
        deg = jnp.maximum(s.sum(-1, keepdims=True), 1.0)
        return jax.nn.relu((s @ x) / deg)

    x = h0["node"]
    saved = []
    for l in range(num_blocks):
        hs, hd = ref_hgcn(adjs[l], x)
        saved.append(hs)
        x = ref_sep(assigns[l], hs)
    for l in range(num_blocks, 0, -1):
        hs, hd = ref_hgcn(adjs[l], x)
        hs = ref_sep(assigns[l - 1].T, hs)
        x = hs + beta * saved[l - 1]
    hs_ref, hd_ref = ref_hgcn(adjs[0], x)

    assert h_src.shape == (n_src[0], embed_size)
    assert h_dst.shape == (n_dst, embed_size)
    assert jnp.allclose(h_src, hs_ref, rtol=2e-2, atol=2e-2), \
        f"h_src max abs err {float(jnp.max(jnp.abs(h_src - hs_ref)))}"
    assert jnp.allclose(h_dst, hd_ref, rtol=2e-2, atol=2e-2), \
        f"h_dst max abs err {float(jnp.max(jnp.abs(h_dst - hd_ref)))}"

    print("KERNEL_OK")
</pallas_src>

<mosaic_0001>
module attributes {stable_mosaic.version = 11 : i64} {
  func.func @_sep_u_kernel(%arg0: i32, %arg1: memref<48x128xf32, #tpu.memory_space<vmem>>, %arg2: memref<40x48xbf16, #tpu.memory_space<vmem>>, %arg3: memref<40x24xbf16, #tpu.memory_space<vmem>>, %arg4: memref<40x16xbf16, #tpu.memory_space<vmem>>, %arg5: memref<40x1xf32, #tpu.memory_space<vmem>>, %arg6: memref<40x1xf32, #tpu.memory_space<vmem>>, %arg7: memref<40x1xf32, #tpu.memory_space<vmem>>, %arg8: memref<48x1xf32, #tpu.memory_space<vmem>>, %arg9: memref<24x1xf32, #tpu.memory_space<vmem>>, %arg10: memref<16x1xf32, #tpu.memory_space<vmem>>, %arg11: memref<24x48xbf16, #tpu.memory_space<vmem>>, %arg12: memref<16x24xbf16, #tpu.memory_space<vmem>>, %arg13: memref<24x1xf32, #tpu.memory_space<vmem>>, %arg14: memref<16x1xf32, #tpu.memory_space<vmem>>, %arg15: memref<48x1xf32, #tpu.memory_space<vmem>>, %arg16: memref<24x1xf32, #tpu.memory_space<vmem>>, %arg17: memref<48x128xf32, #tpu.memory_space<vmem>>, %arg18: memref<40x128xf32, #tpu.memory_space<vmem>>, %arg19: memref<48x128xf32, #tpu.memory_space<vmem>>, %arg20: memref<24x128xf32, #tpu.memory_space<vmem>>) attributes {dimension_semantics = [#tpu.dimension_semantics<parallel>], iteration_bounds = array<i64: 2>, scalar_prefetch = 0 : i64, scratch_operands = 2 : i64, tpu.core_type = #tpu.core_type<tc>, window_params = [{transform_indices = @transform_0, window_bounds = array<i64: 48, 128>}, {pipeline_mode = #tpu.pipeline_mode<synchronous>, transform_indices = @transform_1, window_bounds = array<i64: 40, 48>}, {pipeline_mode = #tpu.pipeline_mode<synchronous>, transform_indices = @transform_2, window_bounds = array<i64: 40, 24>}, {pipeline_mode = #tpu.pipeline_mode<synchronous>, transform_indices = @transform_3, window_bounds = array<i64: 40, 16>}, {pipeline_mode = #tpu.pipeline_mode<synchronous>, transform_indices = @transform_4, window_bounds = array<i64: 40, 1>}, {pipeline_mode = #tpu.pipeline_mode<synchronous>, transform_indices = @transform_5, window_bounds = array<i64: 40, 1>}, {pipeline_mode = #tpu.pipeline_mode<synchronous>, transform_indices = @transform_6, window_bounds = array<i64: 40, 1>}, {pipeline_mode = #tpu.pipeline_mode<synchronous>, transform_indices = @transform_7, window_bounds = array<i64: 48, 1>}, {pipeline_mode = #tpu.pipeline_mode<synchronous>, transform_indices = @transform_8, window_bounds = array<i64: 24, 1>}, {pipeline_mode = #tpu.pipeline_mode<synchronous>, transform_indices = @transform_9, window_bounds = array<i64: 16, 1>}, {pipeline_mode = #tpu.pipeline_mode<synchronous>, transform_indices = @transform_10, window_bounds = array<i64: 24, 48>}, {pipeline_mode = #tpu.pipeline_mode<synchronous>, transform_indices = @transform_11, window_bounds = array<i64: 16, 24>}, {pipeline_mode = #tpu.pipeline_mode<synchronous>, transform_indices = @transform_12, window_bounds = array<i64: 24, 1>}, {pipeline_mode = #tpu.pipeline_mode<synchronous>, transform_indices = @transform_13, window_bounds = array<i64: 16, 1>}, {pipeline_mode = #tpu.pipeline_mode<synchronous>, transform_indices = @transform_14, window_bounds = array<i64: 48, 1>}, {pipeline_mode = #tpu.pipeline_mode<synchronous>, transform_indices = @transform_15, window_bounds = array<i64: 24, 1>}, {transform_indices = @transform_16, window_bounds = array<i64: 48, 128>}, {transform_indices = @transform_17, window_bounds = array<i64: 40, 128>}]} {
    %c0 = arith.constant 0 : index
    %c0_0 = arith.constant 0 : index
    %0 = vector.load %arg1[%c0, %c0_0] : memref<48x128xf32, #tpu.memory_space<vmem>>, vector<48x128xf32>
    %c0_1 = arith.constant 0 : index
    %c0_2 = arith.constant 0 : index
    %1 = vector.load %arg2[%c0_1, %c0_2] : memref<40x48xbf16, #tpu.memory_space<vmem>>, vector<40x48xbf16>
    %2 = arith.truncf %0 : vector<48x128xf32> to vector<48x128xbf16>
    %cst = arith.constant dense<0.000000e+00> : vector<40x128xf32>
    %3 = tpu.matmul %1, %2, %cst {dimension_numbers = #tpu.dot_dimension_numbers<[1], [0], [0], [1], [0, 0, 1, 1], [], []>} : vector<40x48xbf16>, vector<48x128xbf16>, vector<40x128xf32> -> vector<40x128xf32>
    %c0_3 = arith.constant 0 : index
    %c0_4 = arith.constant 0 : index
    %4 = vector.load %arg5[%c0_3, %c0_4] : memref<40x1xf32, #tpu.memory_space<vmem>>, vector<40x1xf32>
    %5 = vector.broadcast %4 : vector<40x1xf32> to vector<40x128xf32>
    %6 = arith.mulf %3, %5 : vector<40x128xf32>
    %7 = arith.truncf %6 : vector<40x128xf32> to vector<40x128xbf16>
    %cst_5 = arith.constant dense<0.000000e+00> : vector<48x128xf32>
    %8 = tpu.matmul %1, %7, %cst_5 {dimension_numbers = #tpu.dot_dimension_numbers<[0], [0], [1], [1], [0, 1, 1, 1], [], []>} : vector<40x48xbf16>, vector<40x128xbf16>, vector<48x128xf32> -> vector<48x128xf32>
    %c0_6 = arith.constant 0 : index
    %c0_7 = arith.constant 0 : index
    %9 = vector.load %arg8[%c0_6, %c0_7] : memref<48x1xf32, #tpu.memory_space<vmem>>, vector<48x1xf32>
    %10 = vector.broadcast %9 : vector<48x1xf32> to vector<48x128xf32>
    %11 = arith.mulf %8, %10 : vector<48x128xf32>
    %c0_8 = arith.constant 0 : index
    %c0_9 = arith.constant 0 : index
    %12 = vector.load %arg19[%c0_8, %c0_9] : memref<48x128xf32, #tpu.memory_space<vmem>>, vector<48x128xf32>
    tpu.vector_store %arg19[%c0_8, %c0_9], %11 {strides = array<i32>} : memref<48x128xf32, #tpu.memory_space<vmem>>, vector<48x128xf32>,
    %c0_10 = arith.constant 0 : index
    %c0_11 = arith.constant 0 : index
    %13 = vector.load %arg11[%c0_10, %c0_11] : memref<24x48xbf16, #tpu.memory_space<vmem>>, vector<24x48xbf16>
    %14 = arith.truncf %11 : vector<48x128xf32> to vector<48x128xbf16>
    %cst_12 = arith.constant dense<0.000000e+00> : vector<24x128xf32>
    %15 = tpu.matmul %13, %14, %cst_12 {dimension_numbers = #tpu.dot_dimension_numbers<[1], [0], [0], [1], [0, 0, 1, 1], [], []>} : vector<24x48xbf16>, vector<48x128xbf16>, vector<24x128xf32> -> vector<24x128xf32>
    %c0_13 = arith.constant 0 : index
    %c0_14 = arith.constant 0 : index
    %16 = vector.load %arg13[%c0_13, %c0_14] : memref<24x1xf32, #tpu.memory_space<vmem>>, vector<24x1xf32>
    %17 = vector.broadcast %16 : vector<24x1xf32> to vector<24x128xf32>
    %18 = arith.mulf %15, %17 : vector<24x128xf32>
    %cst_15 = arith.constant 0.000000e+00 : f32
    %19 = vector.broadcast %cst_15 : f32 to vector<24x128xf32>
    %20 = arith.maximumf %18, %19 : vector<24x128xf32>
    %c0_16 = arith.constant 0 : index
    %c0_17 = arith.constant 0 : index
    %21 = vector.load %arg3[%c0_16, %c0_17] : memref<40x24xbf16, #tpu.memory_space<vmem>>, vector<40x24xbf16>
    %22 = arith.truncf %20 : vector<24x128xf32> to vector<24x128xbf16>
    %cst_18 = arith.constant dense<0.000000e+00> : vector<40x128xf32>
    %23 = tpu.matmul %21, %22, %cst_18 {dimension_numbers = #tpu.dot_dimension_numbers<[1], [0], [0], [1], [0, 0, 1, 1], [], []>} : vector<40x24xbf16>, vector<24x128xbf16>, vector<40x128xf32> -> vector<40x128xf32>
    %c0_19 = arith.constant 0 : index
    %c0_20 = arith.constant 0 : index
    %24 = vector.load %arg6[%c0_19, %c0_20] : memref<40x1xf32, #tpu.memory_space<vmem>>, vector<40x1xf32>
    %25 = vector.broadcast %24 : vector<40x1xf32> to vector<40x128xf32>
    %26 = arith.mulf %23, %25 : vector<40x128xf32>
    %27 = arith.truncf %26 : vector<40x128xf32> to vector<40x128xbf16>
    %cst_21 = arith.constant dense<0.000000e+00> : vector<24x128xf32>
    %28 = tpu.matmul %21, %27, %cst_21 {dimension_numbers = #tpu.dot_dimension_numbers<[0], [0], [1], [1], [0, 1, 1, 1], [], []>} : vector<40x24xbf16>, vector<40x128xbf16>, vector<24x128xf32> -> vector<24x128xf32>
    %c0_22 = arith.constant 0 : index
    %c0_23 = arith.constant 0 : index
    %29 = vector.load %arg9[%c0_22, %c0_23] : memref<24x1xf32, #tpu.memory_space<vmem>>, vector<24x1xf32>
    %30 = vector.broadcast %29 : vector<24x1xf32> to vector<24x128xf32>
    %31 = arith.mulf %28, %30 : vector<24x128xf32>
    %c0_24 = arith.constant 0 : index
    %c0_25 = arith.constant 0 : index
    %32 = vector.load %arg20[%c0_24, %c0_25] : memref<24x128xf32, #tpu.memory_space<vmem>>, vector<24x128xf32>
    tpu.vector_store %arg20[%c0_24, %c0_25], %31 {strides = array<i32>} : memref<24x128xf32, #tpu.memory_space<vmem>>, vector<24x128xf32>,
    %c0_26 = arith.constant 0 : index
    %c0_27 = arith.constant 0 : index
    %33 = vector.load %arg12[%c0_26, %c0_27] : memref<16x24xbf16, #tpu.memory_space<vmem>>, vector<16x24xbf16>
    %34 = arith.truncf %31 : vector<24x128xf32> to vector<24x128xbf16>
    %cst_28 = arith.constant dense<0.000000e+00> : vector<16x128xf32>
    %35 = tpu.matmul %33, %34, %cst_28 {dimension_numbers = #tpu.dot_dimension_numbers<[1], [0], [0], [1], [0, 0, 1, 1], [], []>} : vector<16x24xbf16>, vector<24x128xbf16>, vector<16x128xf32> -> vector<16x128xf32>
    %c0_29 = arith.constant 0 : index
    %c0_30 = arith.constant 0 : index
    %36 = vector.load %arg14[%c0_29, %c0_30] : memref<16x1xf32, #tpu.memory_space<vmem>>, vector<16x1xf32>
    %37 = vector.broadcast %36 : vector<16x1xf32> to vector<16x128xf32>
    %38 = arith.mulf %35, %37 : vector<16x128xf32>
    %cst_31 = arith.constant 0.000000e+00 : f32
    %39 = vector.broadcast %cst_31 : f32 to vector<16x128xf32>
    %40 = arith.maximumf %38, %39 : vector<16x128xf32>
    %c0_32 = arith.constant 0 : index
    %c0_33 = arith.constant 0 : index
    %41 = vector.load %arg4[%c0_32, %c0_33] : memref<40x16xbf16, #tpu.memory_space<vmem>>, vector<40x16xbf16>
    %42 = arith.truncf %40 : vector<16x128xf32> to vector<16x128xbf16>
    %cst_34 = arith.constant dense<0.000000e+00> : vector<40x128xf32>
    %43 = tpu.matmul %41, %42, %cst_34 {dimension_numbers = #tpu.dot_dimension_numbers<[1], [0], [0], [1], [0, 0, 1, 1], [], []>} : vector<40x16xbf16>, vector<16x128xbf16>, vector<40x128xf32> -> vector<40x128xf32>
    %c0_35 = arith.constant 0 : index
    %c0_36 = arith.constant 0 : index
    %44 = vector.load %arg7[%c0_35, %c0_36] : memref<40x1xf32, #tpu.memory_space<vmem>>, vector<40x1xf32>
    %45 = vector.broadcast %44 : vector<40x1xf32> to vector<40x128xf32>
    %46 = arith.mulf %43, %45 : vector<40x128xf32>
    %47 = arith.truncf %46 : vector<40x128xf32> to vector<40x128xbf16>
    %cst_37 = arith.constant dense<0.000000e+00> : vector<16x128xf32>
    %48 = tpu.matmul %41, %47, %cst_37 {dimension_numbers = #tpu.dot_dimension_numbers<[0], [0], [1], [1], [0, 1, 1, 1], [], []>} : vector<40x16xbf16>, vector<40x128xbf16>, vector<16x128xf32> -> vector<16x128xf32>
    %c0_38 = arith.constant 0 : index
    %c0_39 = arith.constant 0 : index
    %49 = vector.load %arg10[%c0_38, %c0_39] : memref<16x1xf32, #tpu.memory_space<vmem>>, vector<16x1xf32>
    %50 = vector.broadcast %49 : vector<16x1xf32> to vector<16x128xf32>
    %51 = arith.mulf %48, %50 : vector<16x128xf32>
    %c0_40 = arith.constant 0 : index
    %c0_41 = arith.constant 0 : index
    %52 = vector.load %arg12[%c0_40, %c0_41] : memref<16x24xbf16, #tpu.memory_space<vmem>>, vector<16x24xbf16>
    %53 = arith.truncf %51 : vector<16x128xf32> to vector<16x128xbf16>
    %cst_42 = arith.constant dense<0.000000e+00> : vector<24x128xf32>
    %54 = tpu.matmul %52, %53, %cst_42 {dimension_numbers = #tpu.dot_dimension_numbers<[0], [0], [1], [1], [0, 1, 1, 1], [], []>} : vector<16x24xbf16>, vector<16x128xbf16>, vector<24x128xf32> -> vector<24x128xf32>
    %c0_43 = arith.constant 0 : index
    %c0_44 = arith.constant 0 : index
    %55 = vector.load %arg16[%c0_43, %c0_44] : memref<24x1xf32, #tpu.memory_space<vmem>>, vector<24x1xf32>
    %56 = vector.broadcast %55 : vector<24x1xf32> to vector<24x128xf32>
    %57 = arith.mulf %54, %56 : vector<24x128xf32>
    %cst_45 = arith.constant 0.000000e+00 : f32
    %58 = vector.broadcast %cst_45 : f32 to vector<24x128xf32>
    %59 = arith.maximumf %57, %58 : vector<24x128xf32>
    %c0_46 = arith.constant 0 : index
    %c0_47 = arith.constant 0 : index
    %60 = vector.load %arg20[%c0_46, %c0_47] : memref<24x128xf32, #tpu.memory_space<vmem>>, vector<24x128xf32>
    %cst_48 = arith.constant 3.000000e-01 : f32
    %61 = vector.broadcast %cst_48 : f32 to vector<24x128xf32>
    %62 = arith.mulf %61, %60 : vector<24x128xf32>
    %63 = arith.addf %59, %62 : vector<24x128xf32>
    %c0_49 = arith.constant 0 : index
    %c0_50 = arith.constant 0 : index
    %64 = vector.load %arg3[%c0_49, %c0_50] : memref<40x24xbf16, #tpu.memory_space<vmem>>, vector<40x24xbf16>
    %65 = arith.truncf %63 : vector<24x128xf32> to vector<24x128xbf16>
    %cst_51 = arith.constant dense<0.000000e+00> : vector<40x128xf32>
    %66 = tpu.matmul %64, %65, %cst_51 {dimension_numbers = #tpu.dot_dimension_numbers<[1], [0], [0], [1], [0, 0, 1, 1], [], []>} : vector<40x24xbf16>, vector<24x128xbf16>, vector<40x128xf32> -> vector<40x128xf32>
    %c0_52 = arith.constant 0 : index
    %c0_53 = arith.constant 0 : index
    %67 = vector.load %arg6[%c0_52, %c0_53] : memref<40x1xf32, #tpu.memory_space<vmem>>, vector<40x1xf32>
    %68 = vector.broadcast %67 : vector<40x1xf32> to vector<40x128xf32>
    %69 = arith.mulf %66, %68 : vector<40x128xf32>
    %70 = arith.truncf %69 : vector<40x128xf32> to vector<40x128xbf16>
    %cst_54 = arith.constant dense<0.000000e+00> : vector<24x128xf32>
    %71 = tpu.matmul %64, %70, %cst_54 {dimension_numbers = #tpu.dot_dimension_numbers<[0], [0], [1], [1], [0, 1, 1, 1], [], []>} : vector<40x24xbf16>, vector<40x128xbf16>, vector<24x128xf32> -> vector<24x128xf32>
    %c0_55 = arith.constant 0 : index
    %c0_56 = arith.constant 0 : index
    %72 = vector.load %arg9[%c0_55, %c0_56] : memref<24x1xf32, #tpu.memory_space<vmem>>, vector<24x1xf32>
    %73 = vector.broadcast %72 : vector<24x1xf32> to vector<24x128xf32>
    %74 = arith.mulf %71, %73 : vector<24x128xf32>
    %c0_57 = arith.constant 0 : index
    %c0_58 = arith.constant 0 : index
    %75 = vector.load %arg11[%c0_57, %c0_58] : memref<24x48xbf16, #tpu.memory_space<vmem>>, vector<24x48xbf16>
    %76 = arith.truncf %74 : vector<24x128xf32> to vector<24x128xbf16>
    %cst_59 = arith.constant dense<0.000000e+00> : vector<48x128xf32>
    %77 = tpu.matmul %75, %76, %cst_59 {dimension_numbers = #tpu.dot_dimension_numbers<[0], [0], [1], [1], [0, 1, 1, 1], [], []>} : vector<24x48xbf16>, vector<24x128xbf16>, vector<48x128xf32> -> vector<48x128xf32>
    %c0_60 = arith.constant 0 : index
    %c0_61 = arith.constant 0 : index
    %78 = vector.load %arg15[%c0_60, %c0_61] : memref<48x1xf32, #tpu.memory_space<vmem>>, vector<48x1xf32>
    %79 = vector.broadcast %78 : vector<48x1xf32> to vector<48x128xf32>
    %80 = arith.mulf %77, %79 : vector<48x128xf32>
    %cst_62 = arith.constant 0.000000e+00 : f32
    %81 = vector.broadcast %cst_62 : f32 to vector<48x128xf32>
    %82 = arith.maximumf %80, %81 : vector<48x128xf32>
    %c0_63 = arith.constant 0 : index
    %c0_64 = arith.constant 0 : index
    %83 = vector.load %arg19[%c0_63, %c0_64] : memref<48x128xf32, #tpu.memory_space<vmem>>, vector<48x128xf32>
    %cst_65 = arith.constant 3.000000e-01 : f32
    %84 = vector.broadcast %cst_65 : f32 to vector<48x128xf32>
    %85 = arith.mulf %84, %83 : vector<48x128xf32>
    %86 = arith.addf %82, %85 : vector<48x128xf32>
    %c0_66 = arith.constant 0 : index
    %c0_67 = arith.constant 0 : index
    %87 = vector.load %arg2[%c0_66, %c0_67] : memref<40x48xbf16, #tpu.memory_space<vmem>>, vector<40x48xbf16>
    %88 = arith.truncf %86 : vector<48x128xf32> to vector<48x128xbf16>
    %cst_68 = arith.constant dense<0.000000e+00> : vector<40x128xf32>
    %89 = tpu.matmul %87, %88, %cst_68 {dimension_numbers = #tpu.dot_dimension_numbers<[1], [0], [0], [1], [0, 0, 1, 1], [], []>} : vector<40x48xbf16>, vector<48x128xbf16>, vector<40x128xf32> -> vector<40x128xf32>
    %c0_69 = arith.constant 0 : index
    %c0_70 = arith.constant 0 : index
    %90 = vector.load %arg5[%c0_69, %c0_70] : memref<40x1xf32, #tpu.memory_space<vmem>>, vector<40x1xf32>
    %91 = vector.broadcast %90 : vector<40x1xf32> to vector<40x128xf32>
    %92 = arith.mulf %89, %91 : vector<40x128xf32>
    %93 = arith.truncf %92 : vector<40x128xf32> to vector<40x128xbf16>
    %cst_71 = arith.constant dense<0.000000e+00> : vector<48x128xf32>
    %94 = tpu.matmul %87, %93, %cst_71 {dimension_numbers = #tpu.dot_dimension_numbers<[0], [0], [1], [1], [0, 1, 1, 1], [], []>} : vector<40x48xbf16>, vector<40x128xbf16>, vector<48x128xf32> -> vector<48x128xf32>
    %c0_72 = arith.constant 0 : index
    %c0_73 = arith.constant 0 : index
    %95 = vector.load %arg8[%c0_72, %c0_73] : memref<48x1xf32, #tpu.memory_space<vmem>>, vector<48x1xf32>
    %96 = vector.broadcast %95 : vector<48x1xf32> to vector<48x128xf32>
    %97 = arith.mulf %94, %96 : vector<48x128xf32>
    %c0_74 = arith.constant 0 : index
    %c0_75 = arith.constant 0 : index
    %98 = vector.load %arg17[%c0_74, %c0_75] : memref<48x128xf32, #tpu.memory_space<vmem>>, vector<48x128xf32>
    tpu.vector_store %arg17[%c0_74, %c0_75], %97 {strides = array<i32>} : memref<48x128xf32, #tpu.memory_space<vmem>>, vector<48x128xf32>,
    %c0_76 = arith.constant 0 : index
    %c0_77 = arith.constant 0 : index
    %99 = vector.load %arg18[%c0_76, %c0_77] : memref<40x128xf32, #tpu.memory_space<vmem>>, vector<40x128xf32>
    tpu.vector_store %arg18[%c0_76, %c0_77], %92 {strides = array<i32>} : memref<40x128xf32, #tpu.memory_space<vmem>>, vector<40x128xf32>,
    return
  }
  func.func @transform_0(%arg0: i32) -> (i32, i32) {
    %c0_i32 = arith.constant 0 : i32
    %c0_i32_0 = arith.constant 0 : i32
    return %c0_i32, %arg0 : i32, i32
  }
  func.func @transform_1(%arg0: i32) -> (i32, i32) {
    %c0_i32 = arith.constant 0 : i32
    %c0_i32_0 = arith.constant 0 : i32
    %c0_i32_1 = arith.constant 0 : i32
    return %c0_i32, %c0_i32_0 : i32, i32
  }
  func.func @transform_2(%arg0: i32) -> (i32, i32) {
    %c0_i32 = arith.constant 0 : i32
    %c0_i32_0 = arith.constant 0 : i32
    %c0_i32_1 = arith.constant 0 : i32
    return %c0_i32, %c0_i32_0 : i32, i32
  }
  func.func @transform_3(%arg0: i32) -> (i32, i32) {
    %c0_i32 = arith.constant 0 : i32
    %c0_i32_0 = arith.constant 0 : i32
    %c0_i32_1 = arith.constant 0 : i32
    return %c0_i32, %c0_i32_0 : i32, i32
  }
  func.func @transform_4(%arg0: i32) -> (i32, i32) {
    %c0_i32 = arith.constant 0 : i32
    %c0_i32_0 = arith.constant 0 : i32
    %c0_i32_1 = arith.constant 0 : i32
    return %c0_i32, %c0_i32_0 : i32, i32
  }
  func.func @transform_5(%arg0: i32) -> (i32, i32) {
    %c0_i32 = arith.constant 0 : i32
    %c0_i32_0 = arith.constant 0 : i32
    %c0_i32_1 = arith.constant 0 : i32
    return %c0_i32, %c0_i32_0 : i32, i32
  }
  func.func @transform_6(%arg0: i32) -> (i32, i32) {
    %c0_i32 = arith.constant 0 : i32
    %c0_i32_0 = arith.constant 0 : i32
    %c0_i32_1 = arith.constant 0 : i32
    return %c0_i32, %c0_i32_0 : i32, i32
  }
  func.func @transform_7(%arg0: i32) -> (i32, i32) {
    %c0_i32 = arith.constant 0 : i32
    %c0_i32_0 = arith.constant 0 : i32
    %c0_i32_1 = arith.constant 0 : i32
    return %c0_i32, %c0_i32_0 : i32, i32
  }
  func.func @transform_8(%arg0: i32) -> (i32, i32) {
    %c0_i32 = arith.constant 0 : i32
    %c0_i32_0 = arith.constant 0 : i32
    %c0_i32_1 = arith.constant 0 : i32
    return %c0_i32, %c0_i32_0 : i32, i32
  }
  func.func @transform_9(%arg0: i32) -> (i32, i32) {
    %c0_i32 = arith.constant 0 : i32
    %c0_i32_0 = arith.constant 0 : i32
    %c0_i32_1 = arith.constant 0 : i32
    return %c0_i32, %c0_i32_0 : i32, i32
  }
  func.func @transform_10(%arg0: i32) -> (i32, i32) {
    %c0_i32 = arith.constant 0 : i32
    %c0_i32_0 = arith.constant 0 : i32
    %c0_i32_1 = arith.constant 0 : i32
    return %c0_i32, %c0_i32_0 : i32, i32
  }
  func.func @transform_11(%arg0: i32) -> (i32, i32) {
    %c0_i32 = arith.constant 0 : i32
    %c0_i32_0 = arith.constant 0 : i32
    %c0_i32_1 = arith.constant 0 : i32
    return %c0_i32, %c0_i32_0 : i32, i32
  }
  func.func @transform_12(%arg0: i32) -> (i32, i32) {
    %c0_i32 = arith.constant 0 : i32
    %c0_i32_0 = arith.constant 0 : i32
    %c0_i32_1 = arith.constant 0 : i32
    return %c0_i32, %c0_i32_0 : i32, i32
  }
  func.func @transform_13(%arg0: i32) -> (i32, i32) {
    %c0_i32 = arith.constant 0 : i32
    %c0_i32_0 = arith.constant 0 : i32
    %c0_i32_1 = arith.constant 0 : i32
    return %c0_i32, %c0_i32_0 : i32, i32
  }
  func.func @transform_14(%arg0: i32) -> (i32, i32) {
    %c0_i32 = arith.constant 0 : i32
    %c0_i32_0 = arith.constant 0 : i32
    %c0_i32_1 = arith.constant 0 : i32
    return %c0_i32, %c0_i32_0 : i32, i32
  }
  func.func @transform_15(%arg0: i32) -> (i32, i32) {
    %c0_i32 = arith.constant 0 : i32
    %c0_i32_0 = arith.constant 0 : i32
    %c0_i32_1 = arith.constant 0 : i32
    return %c0_i32, %c0_i32_0 : i32, i32
  }
  func.func @transform_16(%arg0: i32) -> (i32, i32) {
    %c0_i32 = arith.constant 0 : i32
    %c0_i32_0 = arith.constant 0 : i32
    return %c0_i32, %arg0 : i32, i32
  }
  func.func @transform_17(%arg0: i32) -> (i32, i32) {
    %c0_i32 = arith.constant 0 : i32
    %c0_i32_0 = arith.constant 0 : i32
    return %c0_i32, %arg0 : i32, i32
  }
}

</mosaic_0001>

<llo_original>
// kernel: tpu_custom_call.1
$region0: #{tpu_custom_call.1}
  #allocation0 [shape = 'u32[]', space=smem, size = 0x4, offset = 0x4, fixed_abs, tag = 'smem constant byte address 0x4 - core index']
  #allocation1 [shape = 'u32[144,128]{1,0:T(1,128)}', space=vmem, size = 0x12000, scoped, tag = 'internal scratch']
  #allocation2 [shape = 'f32[48,128]{1,0:T(8,128)}', space=vmem, size = 0x6000, scoped, tag = 'scratch operand']
  #allocation3 [shape = 'f32[24,128]{1,0:T(8,128)}', space=vmem, size = 0x3000, scoped, tag = 'scratch operand']
  %s0 = inlined_call_operand.vmem [shape: f32[48,256], index: 0, kind: input, shape index: {}]
  %s1 = inlined_call_operand.vmem [shape: bf16[40,48], index: 1, kind: input, shape index: {}]
  %s2 = inlined_call_operand.vmem [shape: bf16[40,24], index: 2, kind: input, shape index: {}]
  %s3 = inlined_call_operand.vmem [shape: bf16[40,16], index: 3, kind: input, shape index: {}]
  %s4 = inlined_call_operand.vmem [shape: f32[40,1], index: 4, kind: input, shape index: {}]
  %s5 = inlined_call_operand.vmem [shape: f32[40,1], index: 5, kind: input, shape index: {}]
  %s6 = inlined_call_operand.vmem [shape: f32[40,1], index: 6, kind: input, shape index: {}]
  %s7 = inlined_call_operand.vmem [shape: f32[48,1], index: 7, kind: input, shape index: {}]
  %s8 = inlined_call_operand.vmem [shape: f32[24,1], index: 8, kind: input, shape index: {}]
  %s9 = inlined_call_operand.vmem [shape: f32[16,1], index: 9, kind: input, shape index: {}]
  %s10 = inlined_call_operand.vmem [shape: bf16[24,48], index: 10, kind: input, shape index: {}]
  %s11 = inlined_call_operand.vmem [shape: bf16[16,24], index: 11, kind: input, shape index: {}]
  %s12 = inlined_call_operand.vmem [shape: f32[24,1], index: 12, kind: input, shape index: {}]
  %s13 = inlined_call_operand.vmem [shape: f32[16,1], index: 13, kind: input, shape index: {}]
  %s14 = inlined_call_operand.vmem [shape: f32[48,1], index: 14, kind: input, shape index: {}]
  %s15 = inlined_call_operand.vmem [shape: f32[24,1], index: 15, kind: input, shape index: {}]
  %s16 = inlined_call_operand.hbm [shape: f32[48,256], index: 16, kind: output, shape index: {0}]
  %s17 = inlined_call_operand.hbm [shape: f32[40,256], index: 17, kind: output, shape index: {1}]
  %18 = xla_tuple %s16, %s17
  %s19 = sld [smem:[#allocation0]]
  $region143: #{tpu_custom_call.1} parent=0
    _
  %s21 = ssub.s32 1, %s19
  %s22 = scalar_select 0, %s21, %s19
  $region1: #{tpu_custom_call.1} parent=0
    #allocation4 [shape = 'u8[49152]{0}', space=vmem, size = 0xc000, scoped, tag = 'input window, operand 0']
    #allocation5 [shape = 'u8[49152]{0}', space=vmem, size = 0xc000, scoped, tag = 'output window, operand 0']
    #allocation6 [shape = 's32[2]{0}', space=sflag, size = 0x8, scoped, tag = 'scoped memory for tpu_custom_call.1']
    #allocation7 [shape = 'u8[40960]{0}', space=vmem, size = 0xa000, scoped, tag = 'output window, operand 1']
    #allocation8 [shape = 's32[2]{0}', space=sflag, size = 0x8, scoped, tag = 'scoped memory for tpu_custom_call.1']
    %23 = vsyncpa [#allocation6], 0
    %s24 = scalar_lea.sflag [#allocation6], 1
    %25 = vsyncpa %s24, 0
    %26 = vsyncpa [#allocation8], 0
    %s27 = scalar_lea.sflag [#allocation8], 1
    %28 = vsyncpa %s27, 0
    loop: start=0, step=1, limit=4
    $region2: #{tpu_custom_call.1} parent=1 // loop_pre_header
      _
    $region3: #{tpu_custom_call.1} parent=1 // loop_header
      %s30 = sphi 0, %s34
      %p31 = scmp.ge.s32.totalorder %s30, 4
      %s40 = sphi 0, %s42
      %s43 = sphi 0, %s40
      %s44 = sphi 0, %s43
      %s60 = sphi 0, %s44
      %s64 = sphi 0, %s64
      %s66 = sphi 0, %s64
      %s67 = sphi 0, %s66
      %s81 = sphi 0, %s67
      %s85 = sphi 0, %s85
      %s87 = sphi 0, %s85
      %s88 = sphi 0, %s87
      %s102 = sphi 0, %s88
      %s106 = sphi 0, %s106
      %s108 = sphi 0, %s106
      %s109 = sphi 0, %s108
      %s123 = sphi 0, %s109
      %s127 = sphi 0, %s127
      %s129 = sphi 0, %s127
      %s130 = sphi 0, %s129
      %s144 = sphi 0, %s130
      %s148 = sphi 0, %s148
      %s150 = sphi 0, %s148
      %s151 = sphi 0, %s150
      %s165 = sphi 0, %s151
      %s169 = sphi 0, %s169
      %s171 = sphi 0, %s169
      %s172 = sphi 0, %s171
      %s186 = sphi 0, %s172
      %s190 = sphi 0, %s190
      %s192 = sphi 0, %s190
      %s193 = sphi 0, %s192
      %s207 = sphi 0, %s193
      %s211 = sphi 0, %s211
      %s213 = sphi 0, %s211
      %s214 = sphi 0, %s213
      %s228 = sphi 0, %s214
      %s232 = sphi 0, %s232
      %s234 = sphi 0, %s232
      %s235 = sphi 0, %s234
      %s249 = sphi 0, %s235
      %s253 = sphi 0, %s253
      %s255 = sphi 0, %s253
      %s256 = sphi 0, %s255
      %s270 = sphi 0, %s256
      %s274 = sphi 0, %s274
      %s276 = sphi 0, %s274
      %s277 = sphi 0, %s276
      %s291 = sphi 0, %s277
      %s295 = sphi 0, %s295
      %s297 = sphi 0, %s295
      %s298 = sphi 0, %s297
      %s312 = sphi 0, %s298
      %s316 = sphi 0, %s316
      %s318 = sphi 0, %s316
      %s319 = sphi 0, %s318
      %s333 = sphi 0, %s319
      %s337 = sphi 0, %s337
      %s339 = sphi 0, %s337
      %s340 = sphi 0, %s339
      %s354 = sphi 0, %s340
      %s358 = sphi 0, %s358
      %s360 = sphi 0, %s358
      %s361 = sphi 0, %s360
      %s375 = sphi 0, %s361
      %s381 = sphi 0, %s383
      %s384 = sphi 0, %s381
      %s385 = sphi 0, %s384
      %s401 = sphi 0, %s385
      %s407 = sphi 0, %s409
      %s410 = sphi 0, %s407
      %s411 = sphi 0, %s410
      %s427 = sphi 0, %s411
    $region4: #{tpu_custom_call.1} parent=1 // loop_header_branch
      %33 = sbr.rel (%p31) target = $region8
    $region5: #{tpu_custom_call.1} parent=1 // loop_body
      %s35 = ssub.s32 %s30, 1
      %s36 = ssub.s32 %s30, 2
      %s37 = sadd.s32 %s30, 1
      %s38 = ssub.s32 %s30, %s37
      %p39 = scmp.eq.s32.totalorder %s38, 0
      %s41 = sadd.s32 %s40, 1
      %s42 = scalar_select %p39, %s40, %s41
      %p45 = pneg %p39
      %p46 = scmp.eq.s32.totalorder %s30, 1
      %p47 = por %p45, %p46
      %p48 = scmp.ne.s32.totalorder %s40, %s43
      %p49 = scmp.eq.s32.totalorder %s30, 0
      %p50 = por %p48, %p49
      %p51 = scmp.ne.s32.totalorder %s40, %s43
      %p52 = scmp.eq.s32.totalorder %s35, 1
      %p53 = por %p51, %p52
      %p54 = scmp.ne.s32.totalorder %s43, %s44
      %p55 = scmp.eq.s32.totalorder %s35, 0
      %p56 = por %p54, %p55
      %p57 = scmp.ne.s32.totalorder %s43, %s44
      %p58 = scmp.eq.s32.totalorder %s36, 1
      %p59 = por %p57, %p58
      %p61 = scmp.ne.s32.totalorder %s44, %s60
      %p62 = scmp.eq.s32.totalorder %s36, 0
      %p63 = por %p61, %p62
      %s65 = sadd.s32 %s64, 1
      %p68 = scmp.eq.s32.totalorder %s30, 1
      %p69 = scmp.ne.s32.totalorder %s64, %s66
      %p70 = scmp.eq.s32.totalorder %s30, 0
      %p71 = por %p69, %p70
      %p72 = scmp.ne.s32.totalorder %s64, %s66
      %p73 = scmp.eq.s32.totalorder %s35, 1
      %p74 = por %p72, %p73
      %p75 = scmp.ne.s32.totalorder %s66, %s67
      %p76 = scmp.eq.s32.totalorder %s35, 0
      %p77 = por %p75, %p76
      %p78 = scmp.ne.s32.totalorder %s66, %s67
      %p79 = scmp.eq.s32.totalorder %s36, 1
      %p80 = por %p78, %p79
      %p82 = scmp.ne.s32.totalorder %s67, %s81
      %p83 = scmp.eq.s32.totalorder %s36, 0
      %p84 = por %p82, %p83
      %s86 = sadd.s32 %s85, 1
      %p89 = scmp.eq.s32.totalorder %s30, 1
      %p90 = scmp.ne.s32.totalorder %s85, %s87
      %p91 = scmp.eq.s32.totalorder %s30, 0
      %p92 = por %p90, %p91
      %p93 = scmp.ne.s32.totalorder %s85, %s87
      %p94 = scmp.eq.s32.totalorder %s35, 1
      %p95 = por %p93, %p94
      %p96 = scmp.ne.s32.totalorder %s87, %s88
      %p97 = scmp.eq.s32.totalorder %s35, 0
      %p98 = por %p96, %p97
      %p99 = scmp.ne.s32.totalorder %s87, %s88
      %p100 = scmp.eq.s32.totalorder %s36, 1
      %p101 = por %p99, %p100
      %p103 = scmp.ne.s32.totalorder %s88, %s102
      %p104 = scmp.eq.s32.totalorder %s36, 0
      %p105 = por %p103, %p104
      %s107 = sadd.s32 %s106, 1
      %p110 = scmp.eq.s32.totalorder %s30, 1
      %p111 = scmp.ne.s32.totalorder %s106, %s108
      %p112 = scmp.eq.s32.totalorder %s30, 0
      %p113 = por %p111, %p112
      %p114 = scmp.ne.s32.totalorder %s106, %s108
      %p115 = scmp.eq.s32.totalorder %s35, 1
      %p116 = por %p114, %p115
      %p117 = scmp.ne.s32.totalorder %s108, %s109
      %p118 = scmp.eq.s32.totalorder %s35, 0
      %p119 = por %p117, %p118
      %p120 = scmp.ne.s32.totalorder %s108, %s109
      %p121 = scmp.eq.s32.totalorder %s36, 1
      %p122 = por %p120, %p121
      %p124 = scmp.ne.s32.totalorder %s109, %s123
      %p125 = scmp.eq.s32.totalorder %s36, 0
      %p126 = por %p124, %p125
      %s128 = sadd.s32 %s127, 1
      %p131 = scmp.eq.s32.totalorder %s30, 1
      %p132 = scmp.ne.s32.totalorder %s127, %s129
      %p133 = scmp.eq.s32.totalorder %s30, 0
      %p134 = por %p132, %p133
      %p135 = scmp.ne.s32.totalorder %s127, %s129
      %p136 = scmp.eq.s32.totalorder %s35, 1
      %p137 = por %p135, %p136
      %p138 = scmp.ne.s32.totalorder %s129, %s130
      %p139 = scmp.eq.s32.totalorder %s35, 0
      %p140 = por %p138, %p139
      %p141 = scmp.ne.s32.totalorder %s129, %s130
      %p142 = scmp.eq.s32.totalorder %s36, 1
      %p143 = por %p141, %p142
      %p145 = scmp.ne.s32.totalorder %s130, %s144
      %p146 = scmp.eq.s32.totalorder %s36, 0
      %p147 = por %p145, %p146
      %s149 = sadd.s32 %s148, 1
      %p152 = scmp.eq.s32.totalorder %s30, 1
      %p153 = scmp.ne.s32.totalorder %s148, %s150
      %p154 = scmp.eq.s32.totalorder %s30, 0
      %p155 = por %p153, %p154
      %p156 = scmp.ne.s32.totalorder %s148, %s150
      %p157 = scmp.eq.s32.totalorder %s35, 1
      %p158 = por %p156, %p157
      %p159 = scmp.ne.s32.totalorder %s150, %s151
      %p160 = scmp.eq.s32.totalorder %s35, 0
      %p161 = por %p159, %p160
      %p162 = scmp.ne.s32.totalorder %s150, %s151
      %p163 = scmp.eq.s32.totalorder %s36, 1
      %p164 = por %p162, %p163
      %p166 = scmp.ne.s32.totalorder %s151, %s165
      %p167 = scmp.eq.s32.totalorder %s36, 0
      %p168 = por %p166, %p167
      %s170 = sadd.s32 %s169, 1
      %p173 = scmp.eq.s32.totalorder %s30, 1
      %p174 = scmp.ne.s32.totalorder %s169, %s171
      %p175 = scmp.eq.s32.totalorder %s30, 0
      %p176 = por %p174, %p175
      %p177 = scmp.ne.s32.totalorder %s169, %s171
      %p178 = scmp.eq.s32.totalorder %s35, 1
      %p179 = por %p177, %p178
      %p180 = scmp.ne.s32.totalorder %s171, %s172
      %p181 = scmp.eq.s32.totalorder %s35, 0
      %p182 = por %p180, %p181
      %p183 = scmp.ne.s32.totalorder %s171, %s172
      %p184 = scmp.eq.s32.totalorder %s36, 1
      %p185 = por %p183, %p184
      %p187 = scmp.ne.s32.totalorder %s172, %s186
      %p188 = scmp.eq.s32.totalorder %s36, 0
      %p189 = por %p187, %p188
      %s191 = sadd.s32 %s190, 1
      %p194 = scmp.eq.s32.totalorder %s30, 1
      %p195 = scmp.ne.s32.totalorder %s190, %s192
      %p196 = scmp.eq.s32.totalorder %s30, 0
      %p197 = por %p195, %p196
      %p198 = scmp.ne.s32.totalorder %s190, %s192
      %p199 = scmp.eq.s32.totalorder %s35, 1
      %p200 = por %p198, %p199
      %p201 = scmp.ne.s32.totalorder %s192, %s193
      %p202 = scmp.eq.s32.totalorder %s35, 0
      %p203 = por %p201, %p202
      %p204 = scmp.ne.s32.totalorder %s192, %s193
      %p205 = scmp.eq.s32.totalorder %s36, 1
      %p206 = por %p204, %p205
      %p208 = scmp.ne.s32.totalorder %s193, %s207
      %p209 = scmp.eq.s32.totalorder %s36, 0
      %p210 = por %p208, %p209
      %s212 = sadd.s32 %s211, 1
      %p215 = scmp.eq.s32.totalorder %s30, 1
      %p216 = scmp.ne.s32.totalorder %s211, %s213
      %p217 = scmp.eq.s32.totalorder %s30, 0
      %p218 = por %p216, %p217
      %p219 = scmp.ne.s32.totalorder %s211, %s213
      %p220 = scmp.eq.s32.totalorder %s35, 1
      %p221 = por %p219, %p220
      %p222 = scmp.ne.s32.totalorder %s213, %s214
      %p223 = scmp.eq.s32.totalorder %s35, 0
      %p224 = por %p222, %p223
      %p225 = scmp.ne.s32.totalorder %s213, %s214
      %p226 = scmp.eq.s32.totalorder %s36, 1
      %p227 = por %p225, %p226
      %p229 = scmp.ne.s32.totalorder %s214, %s228
      %p230 = scmp.eq.s32.totalorder %s36, 0
      %p231 = por %p229, %p230
      %s233 = sadd.s32 %s232, 1
      %p236 = scmp.eq.s32.totalorder %s30, 1
      %p237 = scmp.ne.s32.totalorder %s232, %s234
      %p238 = scmp.eq.s32.totalorder %s30, 0
      %p239 = por %p237, %p238
      %p240 = scmp.ne.s32.totalorder %s232, %s234
      %p241 = scmp.eq.s32.totalorder %s35, 1
      %p242 = por %p240, %p241
      %p243 = scmp.ne.s32.totalorder %s234, %s235
      %p244 = scmp.eq.s32.totalorder %s35, 0
      %p245 = por %p243, %p244
      %p246 = scmp.ne.s32.totalorder %s234, %s235
      %p247 = scmp.eq.s32.totalorder %s36, 1
      %p248 = por %p246, %p247
      %p250 = scmp.ne.s32.totalorder %s235, %s249
      %p251 = scmp.eq.s32.totalorder %s36, 0
      %p252 = por %p250, %p251
      %s254 = sadd.s32 %s253, 1
      %p257 = scmp.eq.s32.totalorder %s30, 1
      %p258 = scmp.ne.s32.totalorder %s253, %s255
      %p259 = scmp.eq.s32.totalorder %s30, 0
      %p260 = por %p258, %p259
      %p261 = scmp.ne.s32.totalorder %s253, %s255
      %p262 = scmp.eq.s32.totalorder %s35, 1
      %p263 = por %p261, %p262
      %p264 = scmp.ne.s32.totalorder %s255, %s256
      %p265 = scmp.eq.s32.totalorder %s35, 0
      %p266 = por %p264, %p265
      %p267 = scmp.ne.s32.totalorder %s255, %s256
      %p268 = scmp.eq.s32.totalorder %s36, 1
      %p269 = por %p267, %p268
      %p271 = scmp.ne.s32.totalorder %s256, %s270
      %p272 = scmp.eq.s32.totalorder %s36, 0
      %p273 = por %p271, %p272
      %s275 = sadd.s32 %s274, 1
      %p278 = scmp.eq.s32.totalorder %s30, 1
      %p279 = scmp.ne.s32.totalorder %s274, %s276
      %p280 = scmp.eq.s32.totalorder %s30, 0
      %p281 = por %p279, %p280
      %p282 = scmp.ne.s32.totalorder %s274, %s276
      %p283 = scmp.eq.s32.totalorder %s35, 1
      %p284 = por %p282, %p283
      %p285 = scmp.ne.s32.totalorder %s276, %s277
      %p286 = scmp.eq.s32.totalorder %s35, 0
      %p287 = por %p285, %p286
      %p288 = scmp.ne.s32.totalorder %s276, %s277
      %p289 = scmp.eq.s32.totalorder %s36, 1
      %p290 = por %p288, %p289
      %p292 = scmp.ne.s32.totalorder %s277, %s291
      %p293 = scmp.eq.s32.totalorder %s36, 0
      %p294 = por %p292, %p293
      %s296 = sadd.s32 %s295, 1
      %p299 = scmp.eq.s32.totalorder %s30, 1
      %p300 = scmp.ne.s32.totalorder %s295, %s297
      %p301 = scmp.eq.s32.totalorder %s30, 0
      %p302 = por %p300, %p301
      %p303 = scmp.ne.s32.totalorder %s295, %s297
      %p304 = scmp.eq.s32.totalorder %s35, 1
      %p305 = por %p303, %p304
      %p306 = scmp.ne.s32.totalorder %s297, %s298
      %p307 = scmp.eq.s32.totalorder %s35, 0
      %p308 = por %p306, %p307
      %p309 = scmp.ne.s32.totalorder %s297, %s298
      %p310 = scmp.eq.s32.totalorder %s36, 1
      %p311 = por %p309, %p310
      %p313 = scmp.ne.s32.totalorder %s298, %s312
      %p314 = scmp.eq.s32.totalorder %s36, 0
      %p315 = por %p313, %p314
      %s317 = sadd.s32 %s316, 1
      %p320 = scmp.eq.s32.totalorder %s30, 1
      %p321 = scmp.ne.s32.totalorder %s316, %s318
      %p322 = scmp.eq.s32.totalorder %s30, 0
      %p323 = por %p321, %p322
      %p324 = scmp.ne.s32.totalorder %s316, %s318
      %p325 = scmp.eq.s32.totalorder %s35, 1
      %p326 = por %p324, %p325
      %p327 = scmp.ne.s32.totalorder %s318, %s319
      %p328 = scmp.eq.s32.totalorder %s35, 0
      %p329 = por %p327, %p328
      %p330 = scmp.ne.s32.totalorder %s318, %s319
      %p331 = scmp.eq.s32.totalorder %s36, 1
      %p332 = por %p330, %p331
      %p334 = scmp.ne.s32.totalorder %s319, %s333
      %p335 = scmp.eq.s32.totalorder %s36, 0
      %p336 = por %p334, %p335
      %s338 = sadd.s32 %s337, 1
      %p341 = scmp.eq.s32.totalorder %s30, 1
      %p342 = scmp.ne.s32.totalorder %s337, %s339
      %p343 = scmp.eq.s32.totalorder %s30, 0
      %p344 = por %p342, %p343
      %p345 = scmp.ne.s32.totalorder %s337, %s339
      %p346 = scmp.eq.s32.totalorder %s35, 1
      %p347 = por %p345, %p346
      %p348 = scmp.ne.s32.totalorder %s339, %s340
      %p349 = scmp.eq.s32.totalorder %s35, 0
      %p350 = por %p348, %p349
      %p351 = scmp.ne.s32.totalorder %s339, %s340
      %p352 = scmp.eq.s32.totalorder %s36, 1
      %p353 = por %p351, %p352
      %p355 = scmp.ne.s32.totalorder %s340, %s354
      %p356 = scmp.eq.s32.totalorder %s36, 0
      %p357 = por %p355, %p356
      %s359 = sadd.s32 %s358, 1
      %p362 = scmp.eq.s32.totalorder %s30, 1
      %p363 = scmp.ne.s32.totalorder %s358, %s360
      %p364 = scmp.eq.s32.totalorder %s30, 0
      %p365 = por %p363, %p364
      %p366 = scmp.ne.s32.totalorder %s358, %s360
      %p367 = scmp.eq.s32.totalorder %s35, 1
      %p368 = por %p366, %p367
      %p369 = scmp.ne.s32.totalorder %s360, %s361
      %p370 = scmp.eq.s32.totalorder %s35, 0
      %p371 = por %p369, %p370
      %p372 = scmp.ne.s32.totalorder %s360, %s361
      %p373 = scmp.eq.s32.totalorder %s36, 1
      %p374 = por %p372, %p373
      %p376 = scmp.ne.s32.totalorder %s361, %s375
      %p377 = scmp.eq.s32.totalorder %s36, 0
      %p378 = por %p376, %p377
      %s379 = ssub.s32 %s30, %s37
      %p380 = scmp.eq.s32.totalorder %s379, 0
      %s382 = sadd.s32 %s381, 1
      %s383 = scalar_select %p380, %s381, %s382
      %p386 = pneg %p380
      %p387 = scmp.eq.s32.totalorder %s30, 1
      %p388 = por %p386, %p387
      %p389 = scmp.ne.s32.totalorder %s381, %s384
      %p390 = scmp.eq.s32.totalorder %s30, 0
      %p391 = por %p389, %p390
      %p392 = scmp.ne.s32.totalorder %s381, %s384
      %p393 = scmp.eq.s32.totalorder %s35, 1
      %p394 = por %p392, %p393
      %p395 = scmp.ne.s32.totalorder %s384, %s385
      %p396 = scmp.eq.s32.totalorder %s35, 0
      %p397 = por %p395, %p396
      %p398 = scmp.ne.s32.totalorder %s384, %s385
      %p399 = scmp.eq.s32.totalorder %s36, 1
      %p400 = por %p398, %p399
      %p402 = scmp.ne.s32.totalorder %s385, %s401
      %p403 = scmp.eq.s32.totalorder %s36, 0
      %p404 = por %p402, %p403
      %s405 = ssub.s32 %s30, %s37
      %p406 = scmp.eq.s32.totalorder %s405, 0
      %s408 = sadd.s32 %s407, 1
      %s409 = scalar_select %p406, %s407, %s408
      %p412 = pneg %p406
      %p413 = scmp.eq.s32.totalorder %s30, 1
      %p414 = por %p412, %p413
      %p415 = scmp.ne.s32.totalorder %s407, %s410
      %p416 = scmp.eq.s32.totalorder %s30, 0
      %p417 = por %p415, %p416
      %p418 = scmp.ne.s32.totalorder %s407, %s410
      %p419 = scmp.eq.s32.totalorder %s35, 1
      %p420 = por %p418, %p419
      %p421 = scmp.ne.s32.totalorder %s410, %s411
      %p422 = scmp.eq.s32.totalorder %s35, 0
      %p423 = por %p421, %p422
      %p424 = scmp.ne.s32.totalorder %s410, %s411
      %p425 = scmp.eq.s32.totalorder %s36, 1
      %p426 = por %p424, %p425
      %p428 = scmp.ne.s32.totalorder %s411, %s427
      %p429 = scmp.eq.s32.totalorder %s36, 0
      %p430 = por %p428, %p429
      %p431 = scmp.le.s32.totalorder 1, %s30
      %p432 = scmp.lt.s32.totalorder %s30, 3
      %p433 = pnand %p431, %p432
      %p434 = pneg %p433
      // Predicated region
      $region9: #{tpu_custom_call.1} parent=5 // pred_check
        _
      $region10: #{tpu_custom_call.1} parent=5 // pred_check_branch
        %436 = sbr.rel (%p433) target = $region12
      $region11: #{tpu_custom_call.1} parent=5 // pred_region
        %s437 = ssub.s32 %s30, 1
        // Predicated region
        $region13: #{tpu_custom_call.1} parent=11 // pred_check
          %p438 = pneg %p77
        $region14: #{tpu_custom_call.1} parent=11 // pred_check_branch
          %440 = sbr.rel (%p438) target = $region16
        $region15: #{tpu_custom_call.1} parent=11 // pred_region
          _
        $region16: #{tpu_custom_call.1} parent=11 // pred_fallthru
          _
        // Predicated region
        $region17: #{tpu_custom_call.1} parent=11 // pred_check
          %p441 = pneg %p98
        $region18: #{tpu_custom_call.1} parent=11 // pred_check_branch
          %443 = sbr.rel (%p441) target = $region20
        $region19: #{tpu_custom_call.1} parent=11 // pred_region
          _
        $region20: #{tpu_custom_call.1} parent=11 // pred_fallthru
          _
        // Predicated region
        $region21: #{tpu_custom_call.1} parent=11 // pred_check
          %p444 = pneg %p119
        $region22: #{tpu_custom_call.1} parent=11 // pred_check_branch
          %446 = sbr.rel (%p444) target = $region24
        $region23: #{tpu_custom_call.1} parent=11 // pred_region
          _
        $region24: #{tpu_custom_call.1} parent=11 // pred_fallthru
          _
        // Predicated region
        $region25: #{tpu_custom_call.1} parent=11 // pred_check
          %p447 = pneg %p140
        $region26: #{tpu_custom_call.1} parent=11 // pred_check_branch
          %449 = sbr.rel (%p447) target = $region28
        $region27: #{tpu_custom_call.1} parent=11 // pred_region
          _
        $region28: #{tpu_custom_call.1} parent=11 // pred_fallthru
          _
        // Predicated region
        $region29: #{tpu_custom_call.1} parent=11 // pred_check
          %p450 = pneg %p161
        $region30: #{tpu_custom_call.1} parent=11 // pred_check_branch
          %452 = sbr.rel (%p450) target = $region32
        $region31: #{tpu_custom_call.1} parent=11 // pred_region
          _
        $region32: #{tpu_custom_call.1} parent=11 // pred_fallthru
          _
        // Predicated region
        $region33: #{tpu_custom_call.1} parent=11 // pred_check
          %p453 = pneg %p182
        $region34: #{tpu_custom_call.1} parent=11 // pred_check_branch
          %455 = sbr.rel (%p453) target = $region36
        $region35: #{tpu_custom_call.1} parent=11 // pred_region
          _
        $region36: #{tpu_custom_call.1} parent=11 // pred_fallthru
          _
        // Predicated region
        $region37: #{tpu_custom_call.1} parent=11 // pred_check
          %p456 = pneg %p203
        $region38: #{tpu_custom_call.1} parent=11 // pred_check_branch
          %458 = sbr.rel (%p456) target = $region40
        $region39: #{tpu_custom_call.1} parent=11 // pred_region
          _
        $region40: #{tpu_custom_call.1} parent=11 // pred_fallthru
          _
        // Predicated region
        $region41: #{tpu_custom_call.1} parent=11 // pred_check
          %p459 = pneg %p224
        $region42: #{tpu_custom_call.1} parent=11 // pred_check_branch
          %461 = sbr.rel (%p459) target = $region44
        $region43: #{tpu_custom_call.1} parent=11 // pred_region
          _
        $region44: #{tpu_custom_call.1} parent=11 // pred_fallthru
          _
        // Predicated region
        $region45: #{tpu_custom_call.1} parent=11 // pred_check
          %p462 = pneg %p245
        $region46: #{tpu_custom_call.1} parent=11 // pred_check_branch
          %464 = sbr.rel (%p462) target = $region48
        $region47: #{tpu_custom_call.1} parent=11 // pred_region
          _
        $region48: #{tpu_custom_call.1} parent=11 // pred_fallthru
          _
        // Predicated region
        $region49: #{tpu_custom_call.1} parent=11 // pred_check
          %p465 = pneg %p266
        $region50: #{tpu_custom_call.1} parent=11 // pred_check_branch
          %467 = sbr.rel (%p465) target = $region52
        $region51: #{tpu_custom_call.1} parent=11 // pred_region
          _
        $region52: #{tpu_custom_call.1} parent=11 // pred_fallthru
          _
        // Predicated region
        $region53: #{tpu_custom_call.1} parent=11 // pred_check
          %p468 = pneg %p287
        $region54: #{tpu_custom_call.1} parent=11 // pred_check_branch
          %470 = sbr.rel (%p468) target = $region56
        $region55: #{tpu_custom_call.1} parent=11 // pred_region
          _
        $region56: #{tpu_custom_call.1} parent=11 // pred_fallthru
          _
        // Predicated region
        $region57: #{tpu_custom_call.1} parent=11 // pred_check
          %p471 = pneg %p308
        $region58: #{tpu_custom_call.1} parent=11 // pred_check_branch
          %473 = sbr.rel (%p471) target = $region60
        $region59: #{tpu_custom_call.1} parent=11 // pred_region
          _
        $region60: #{tpu_custom_call.1} parent=11 // pred_fallthru
          _
        // Predicated region
        $region61: #{tpu_custom_call.1} parent=11 // pred_check
          %p474 = pneg %p329
        $region62: #{tpu_custom_call.1} parent=11 // pred_check_branch
          %476 = sbr.rel (%p474) target = $region64
        $region63: #{tpu_custom_call.1} parent=11 // pred_region
          _
        $region64: #{tpu_custom_call.1} parent=11 // pred_fallthru
          _
        // Predicated region
        $region65: #{tpu_custom_call.1} parent=11 // pred_check
          %p477 = pneg %p350
        $region66: #{tpu_custom_call.1} parent=11 // pred_check_branch
          %479 = sbr.rel (%p477) target = $region68
        $region67: #{tpu_custom_call.1} parent=11 // pred_region
          _
        $region68: #{tpu_custom_call.1} parent=11 // pred_fallthru
          _
        // Predicated region
        $region69: #{tpu_custom_call.1} parent=11 // pred_check
          %p480 = pneg %p371
        $region70: #{tpu_custom_call.1} parent=11 // pred_check_branch
          %482 = sbr.rel (%p480) target = $region72
        $region71: #{tpu_custom_call.1} parent=11 // pred_region
          _
        $region72: #{tpu_custom_call.1} parent=11 // pred_fallthru
          _
      $region12: #{tpu_custom_call.1} parent=5 // pred_fallthru
        _
      %p483 = scmp.lt.s32.totalorder %s30, 2
      // Predicated region
      $region73: #{tpu_custom_call.1} parent=5 // pred_check
        %p484 = pneg %p483
      $region74: #{tpu_custom_call.1} parent=5 // pred_check_branch
        %486 = sbr.rel (%p484) target = $region76
      $region75: #{tpu_custom_call.1} parent=5 // pred_region
        // Predicated region
        $region77: #{tpu_custom_call.1} parent=75 // pred_check
          %p487 = pneg %p50
        $region78: #{tpu_custom_call.1} parent=75 // pred_check_branch
          %489 = sbr.rel (%p487) target = $region80
        $region79: #{tpu_custom_call.1} parent=75 // pred_region
          %s490 = sand.u32 %s40, 1
          %s491 = sand.u32 %s40, 1
          %s492 = smul.addr %s491, 48
          %s493 = scalar_lea.vmem [#allocation4], %s492
          %s494 = smul.addr %s30, 8
          %s495 = scalar_lea.vmem %s0, %s494
          // Predicated region
          $region81: #{tpu_custom_call.1} parent=79 // pred_check
            _
          $region82: #{tpu_custom_call.1} parent=79 // pred_check_branch
            %497 = sbr.rel (0) target = $region84
          $region83: #{tpu_custom_call.1} parent=79 // pred_region
            // Predicated region
            $region85: #{tpu_custom_call.1} parent=83 // pred_check
              _
            $region86: #{tpu_custom_call.1} parent=83 // pred_check_branch
              %499 = sbr.rel (0) target = $region88
            $region87: #{tpu_custom_call.1} parent=83 // pred_region
              // Predicated region
              $region100: #{tpu_custom_call.1} parent=87 // pred_check
                _
              $region101: #{tpu_custom_call.1} parent=87 // pred_check_branch
                %525 = sbr.rel (0) target = $region103
              $region102: #{tpu_custom_call.1} parent=87 // pred_region
                loop: start=0, step=1, limit=1
                $region104: #{tpu_custom_call.1} parent=102 // loop_pre_header
                  _
                $region105: #{tpu_custom_call.1} parent=102 // loop_header
                  %s527 = sphi 0, %s531
                  %p528 = scmp.ge.s32.totalorder %s527, 1
                  %s532 = sphi %s495, %s495
                  %s533 = sphi %s493, %s493
                $region106: #{tpu_custom_call.1} parent=102 // loop_header_branch
                  %530 = sbr.rel (%p528) target = $region110
                $region107: #{tpu_custom_call.1} parent=102 // loop_body
                  %v534 = vld [vmem:[%s532] sm:$0xff]
                  %535 = vst [vmem:[%s533] sm:$0xff] %v534
                  %v536 = vld [vmem:[%s532 + $0x10] sm:$0xff]
                  %537 = vst [vmem:[%s533 + $0x8] sm:$0xff] %v536
                  %v538 = vld [vmem:[%s532 + $0x20] sm:$0xff]
                  %539 = vst [vmem:[%s533 + $0x10] sm:$0xff] %v538
                  %v540 = vld [vmem:[%s532 + $0x30] sm:$0xff]
                  %541 = vst [vmem:[%s533 + $0x18] sm:$0xff] %v540
                  %v542 = vld [vmem:[%s532 + $0x40] sm:$0xff]
                  %543 = vst [vmem:[%s533 + $0x20] sm:$0xff] %v542
                  %v544 = vld [vmem:[%s532 + $0x50] sm:$0xff]
                  %545 = vst [vmem:[%s533 + $0x28] sm:$0xff] %v544
                $region108: #{tpu_custom_call.1} parent=102 // loop_footer
                  %s531 = sadd.s32 1, %s527
                $region109: #{tpu_custom_call.1} parent=102 // loop_footer_branch
                  %526 = sbr.rel target = $region105
                $region110: #{tpu_custom_call.1} parent=102 // loop_exit
                  _
              $region103: #{tpu_custom_call.1} parent=87 // pred_fallthru
                _
              // Predicated region
              $region111: #{tpu_custom_call.1} parent=87 // pred_check
                _
              $region112: #{tpu_custom_call.1} parent=87 // pred_check_branch
                %547 = sbr.rel target = $region114
              $region113: #{tpu_custom_call.1} parent=87 // pred_region
                _
              $region114: #{tpu_custom_call.1} parent=87 // pred_fallthru
                _
            $region88: #{tpu_custom_call.1} parent=83 // pred_fallthru
              _
            // Predicated region
            $region89: #{tpu_custom_call.1} parent=83 // pred_check
              _
            $region90: #{tpu_custom_call.1} parent=83 // pred_check_branch
              %501 = sbr.rel target = $region92
            $region91: #{tpu_custom_call.1} parent=83 // pred_region
              %s503 = ssub.s32 256, 1
              loop: start=0, step=1, limit=1
              $region93: #{tpu_custom_call.1} parent=91 // loop_pre_header
                _
              $region94: #{tpu_custom_call.1} parent=91 // loop_header
                %s505 = sphi 0, %s509
                %p506 = scmp.ge.s32.totalorder %s505, 1
                %s510 = sphi %s495, %s495
                %s511 = sphi %s493, %s493
              $region95: #{tpu_custom_call.1} parent=91 // loop_header_branch
                %508 = sbr.rel (%p506) target = $region99
              $region96: #{tpu_custom_call.1} parent=91 // loop_body
                %v512 = vld [vmem:[%s510] sm:%s503]
                %513 = vst [vmem:[%s511] sm:%s503] %v512
                %v514 = vld [vmem:[%s510 + $0x10] sm:%s503]
                %515 = vst [vmem:[%s511 + $0x8] sm:%s503] %v514
                %v516 = vld [vmem:[%s510 + $0x20] sm:%s503]
                %517 = vst [vmem:[%s511 + $0x10] sm:%s503] %v516
                %v518 = vld [vmem:[%s510 + $0x30] sm:%s503]
                %519 = vst [vmem:[%s511 + $0x18] sm:%s503] %v518
                %v520 = vld [vmem:[%s510 + $0x40] sm:%s503]
                %521 = vst [vmem:[%s511 + $0x20] sm:%s503] %v520
                %v522 = vld [vmem:[%s510 + $0x50] sm:%s503]
                %523 = vst [vmem:[%s511 + $0x28] sm:%s503] %v522
              $region97: #{tpu_custom_call.1} parent=91 // loop_footer
                %s509 = sadd.s32 1, %s505
              $region98: #{tpu_custom_call.1} parent=91 // loop_footer_branch
                %504 = sbr.rel target = $region94
              $region99: #{tpu_custom_call.1} parent=91 // loop_exit
                _
            $region92: #{tpu_custom_call.1} parent=83 // pred_fallthru
              _
          $region84: #{tpu_custom_call.1} parent=79 // pred_fallthru
            _
          %548 = vnop
        $region80: #{tpu_custom_call.1} parent=75 // pred_fallthru
          _
      $region76: #{tpu_custom_call.1} parent=5 // pred_fallthru
        _
      %p549 = scmp.le.s32.totalorder 1, %s30
      %p550 = scmp.lt.s32.totalorder %s30, 3
      %p551 = pnand %p549, %p550
      %p552 = pneg %p551
      // Predicated region
      $region115: #{tpu_custom_call.1} parent=5 // pred_check
        _
      $region116: #{tpu_custom_call.1} parent=5 // pred_check_branch
        %554 = sbr.rel (%p551) target = $region118
      $region117: #{tpu_custom_call.1} parent=5 // pred_region
        %s555 = ssub.s32 %s30, 1
        %s556 = sand.u32 %s43, 1
        %s557 = sand.u32 %s43, 1
        %s558 = smul.addr %s557, 48
        %s559 = scalar_lea.vmem [#allocation4], %s558
        // Predicated region
        $region119: #{tpu_custom_call.1} parent=117 // pred_check
          %p560 = pneg %p56
        $region120: #{tpu_custom_call.1} parent=117 // pred_check_branch
          %562 = sbr.rel (%p560) target = $region122
        $region121: #{tpu_custom_call.1} parent=117 // pred_region
          _
        $region122: #{tpu_custom_call.1} parent=117 // pred_fallthru
          _
        %s563 = sand.u32 %s43, 1
        %s564 = sand.u32 %s43, 1
        %s565 = smul.addr %s564, 48
        %s566 = scalar_lea.vmem [#allocation4], %s565
        %p567 = pneg %p56
        %p568 = pneg %p53
        %p569 = pneg %p77
        %p570 = pneg %p74
        %p571 = pneg %p98
        %p572 = pneg %p95
        %p573 = pneg %p119
        %p574 = pneg %p116
        %p575 = pneg %p140
        %p576 = pneg %p137
        %p577 = pneg %p161
        %p578 = pneg %p158
        %p579 = pneg %p182
        %p580 = pneg %p179
        %p581 = pneg %p203
        %p582 = pneg %p200
        %p583 = pneg %p224
        %p584 = pneg %p221
        %p585 = pneg %p245
        %p586 = pneg %p242
        %p587 = pneg %p266
        %p588 = pneg %p263
        %p589 = pneg %p287
        %p590 = pneg %p284
        %p591 = pneg %p308
        %p592 = pneg %p305
        %p593 = pneg %p329
        %p594 = pneg %p326
        %p595 = pneg %p350
        %p596 = pneg %p347
        %p597 = pneg %p371
        %p598 = pneg %p368
        %p599 = pneg %p397
        %p600 = pneg %p394
        %s601 = sand.u32 %s384, 1
        %s602 = scalar_lea.sflag [#allocation6], %s601
        %s603 = sand.u32 %s384, 1
        %s604 = smul.addr %s603, 48
        %s605 = scalar_lea.vmem [#allocation5], %s604
        %p606 = pneg %p423
        %p607 = pneg %p420
        %s608 = sand.u32 %s410, 1
        %s609 = scalar_lea.sflag [#allocation8], %s608
        %s610 = sand.u32 %s410, 1
        %s611 = smul.addr %s610, 40
        %s612 = scalar_lea.vmem [#allocation7], %s611
        %v614 = vld [vmem:[%s559] sm:$0xff]
        %v615 = vld [vmem:[%s559 + $0x8] sm:$0xff]
        %v616 = vld [vmem:[%s559 + $0x10] sm:$0xff]
        %v617 = vld [vmem:[%s559 + $0x18] sm:$0xff]
        %v618 = vld [vmem:[%s559 + $0x20] sm:$0xff]
        %v619 = vld [vmem:[%s559 + $0x28] sm:$0xff]
        %v620 = vld [vmem:[%s1] sm:$0xf]
        %v621 = vld [vmem:[%s1 + $0x4] sm:$0xf]
        %v622 = vld [vmem:[%s1 + $0x8] sm:$0xf]
        %v623 = vld [vmem:[%s1 + $0xc] sm:$0xf]
        %v624 = vld [vmem:[%s1 + $0x10] sm:$0xf]
        %v625 = vpack.c.bf16 %v615, %v614
        %v626 = vpack.c.bf16 %v617, %v616
        %v627 = vpack.c.bf16 %v619, %v618
        %v633 = vunpack.c.l.b16 %v620
        %v634 = vunpack.c.l.b16 %v621
        %v635 = vunpack.c.l.b16 %v622
        %v636 = vunpack.c.l.b16 %v623
        %v637 = vunpack.c.l.b16 %v624
        %v638 = vpack.c.b16 %v634, %v633
        %v639 = vpack.c.b16 %v636, %v635
        %v640 = vpack.c.b16 %v637, %v637
        %vm641 = vcmask 392192
        %v643 = vsel %vm641, %v638, 0
        %v646 = vsel %vm641, %v639, 0
        %v649 = vsel %vm641, %v640, 0
        %651 = vmatprep.subr.bf16.mxu0 0
        %652 = vmatpush1.bf16.msra.mxu0 0
        %653 = vmatprep.subr.bf16.mxu0 0
        %654 = vmatpush1.bf16.msra.mxu0 0
        %655 = vmatprep.subr.bf16.mxu0 0
        %656 = vmatpush1.bf16.msra.mxu0 0
        %657 = vmatprep.subr.bf16.mxu0 0
        %658 = vmatpush1.bf16.msra.mxu0 0
        %659 = vmatprep.subr.bf16.mxu0 0
        %660 = vmatpush1.bf16.msra.mxu0 0
        %661 = vmatprep.subr.bf16.mxu0 0
        %662 = vmatpush1.bf16.msra.mxu0 %v627
        %663 = vmatprep.subr.bf16.mxu0 0
        %664 = vmatpush1.bf16.msra.mxu0 %v626
        %665 = vmatprep.subr.bf16.mxu0 0
        %666 = vmatpush1.bf16.msra.mxu0 %v625
        %667 = vmatprep.subr.bf16.mxu0 0
        %668 = vmatpush2.bf16.msra.mxu0 0
        %669 = vmatprep.subr.bf16.mxu0 0
        %670 = vmatpush2.bf16.msra.mxu0 0
        %671 = vmatprep.subr.bf16.mxu0 0
        %672 = vmatpush2.bf16.msra.mxu0 0
        %673 = vmatprep.subr.bf16.mxu0 0
        %674 = vmatpush2.bf16.msra.mxu0 0
        %675 = vmatprep.subr.bf16.mxu0 0
        %676 = vmatpush2.bf16.msra.mxu0 0
        %677 = vmatprep.subr.bf16.mxu0 0
        %678 = vmatpush2.bf16.msra.mxu0 0
        %679 = vmatprep.subr.bf16.mxu0 0
        %680 = vmatpush2.bf16.msra.mxu0 0
        %681 = vmatprep.subr.bf16.mxu0 0
        %682 = vmatpush2.bf16.msra.mxu0 0
        %683 = vmatprep.mubr.bf16.mxu0 0
        %684 = vmatmul.mubr.bf16.gmra.mxu0 %v643
        %v685 = vpop.f32.mrf.mxu0
        %v686 = vadd.f32 0.0, %v685
        %v687 = vpop.f32.mrf.mxu0
        %v688 = vpop.f32.mrf.mxu0
        %v689 = vadd.f32 0.0, %v688
        %v690 = vpop.f32.mrf.mxu0
        %691 = vmatprep.mubr.bf16.mxu0 0
        %692 = vmatmul.mubr.bf16.gmra.mxu0 %v646
        %v693 = vpop.f32.mrf.mxu0
        %v694 = vadd.f32 0.0, %v693
        %v695 = vpop.f32.mrf.mxu0
        %v696 = vpop.f32.mrf.mxu0
        %v697 = vadd.f32 0.0, %v696
        %v698 = vpop.f32.mrf.mxu0
        %699 = vmatprep.mubr.bf16.mxu0 0
        %700 = vmatmul.mubr.bf16.gmra.mxu0 %v649
        %v701 = vpop.f32.mrf.mxu0
        %v702 = vadd.f32 0.0, %v701
        %v703 = vpop.f32.mrf.mxu0
        %v704 = vpop.f32.mrf.mxu0
        %v705 = vpop.f32.mrf.mxu0
        %706 = vdwg.mxu0
        %v707 = vld [vmem:[%s4] sm:$0xff]
        %v708 = vld [vmem:[%s4 + $0x8] sm:$0xff]
        %v709 = vld [vmem:[%s4 + $0x10] sm:$0xff]
        %v710 = vld [vmem:[%s4 + $0x18] sm:$0xff]
        %v711 = vld [vmem:[%s4 + $0x20] sm:$0xff]
        %713 = vset.pattern.permute.xlu0 0
        %714 = vperm.xlu0 %713, %v707
        %v715 = vpop.permute.xlu0 %714
        %718 = vset.pattern.permute.xlu0 0
        %719 = vperm.xlu0 %718, %v708
        %v720 = vpop.permute.xlu0 %719
        %723 = vset.pattern.permute.xlu0 0
        %724 = vperm.xlu0 %723, %v709
        %v725 = vpop.permute.xlu0 %724
        %728 = vset.pattern.permute.xlu0 0
        %729 = vperm.xlu0 %728, %v710
        %v730 = vpop.permute.xlu0 %729
        %733 = vset.pattern.permute.xlu0 0
        %734 = vperm.xlu0 %733, %v711
        %v735 = vpop.permute.xlu0 %734
        %v737 = vmul.f32 %v686, %v715
        %v738 = vmul.f32 %v689, %v720
        %v739 = vmul.f32 %v694, %v725
        %v740 = vmul.f32 %v697, %v730
        %v741 = vmul.f32 %v702, %v735
        %v742 = vpack.c.bf16 %v738, %v737
        %v743 = vpack.c.bf16 %v740, %v739
        %v744 = vpack.c.bf16 %v741, %v741
        %748 = vxpose.xlu0.c.b16.start [1/8] %v638, 128
        %749 = vxpose.xlu0.c.b16.cont [2/8] %v639, 128
        %750 = vxpose.xlu0.c.b16.cont [3/8] %v640, 128
        %751 = vxpose.xlu0.c.b16.cont [4/8] 0, 128
        %752 = vxpose.xlu0.c.b16.cont [5/8] 0, 128
        %753 = vxpose.xlu0.c.b16.cont [6/8] 0, 128
        %754 = vxpose.xlu0.c.b16.cont [7/8] 0, 128
        %755 = vxpose.xlu0.c.b16.end [8/8] 0, 128
        %v756 = vpop.trf.xlu0
        %v757 = vpop.trf.xlu0
        %v758 = vpop.trf.xlu0
        %v759 = vpop.trf.xlu0
        %v760 = vpop.trf.xlu0
        %v761 = vpop.trf.xlu0
        %v762 = vpop.trf.xlu0
        %v763 = vpop.trf.xlu0
        %vm764 = vcmask 326656
        %v766 = vsel %vm764, %v756, 0
        %v769 = vsel %vm764, %v757, 0
        %v772 = vsel %vm764, %v758, 0
        %vm774 = vcmask 1043456
        %v776 = vsel %vm774, %v744, 0
        %778 = vmatprep.subr.bf16.mxu0 0
        %779 = vmatpush1.bf16.msra.mxu0 0
        %780 = vmatprep.subr.bf16.mxu0 0
        %781 = vmatpush1.bf16.msra.mxu0 0
        %782 = vmatprep.subr.bf16.mxu0 0
        %783 = vmatpush1.bf16.msra.mxu0 0
        %784 = vmatprep.subr.bf16.mxu0 0
        %785 = vmatpush1.bf16.msra.mxu0 0
        %786 = vmatprep.subr.bf16.mxu0 0
        %787 = vmatpush1.bf16.msra.mxu0 0
        %788 = vmatprep.subr.bf16.mxu0 0
        %789 = vmatpush1.bf16.msra.mxu0 %v776
        %790 = vmatprep.subr.bf16.mxu0 0
        %791 = vmatpush1.bf16.msra.mxu0 %v743
        %792 = vmatprep.subr.bf16.mxu0 0
        %793 = vmatpush1.bf16.msra.mxu0 %v742
        %794 = vmatprep.subr.bf16.mxu0 0
        %795 = vmatpush2.bf16.msra.mxu0 0
        %796 = vmatprep.subr.bf16.mxu0 0
        %797 = vmatpush2.bf16.msra.mxu0 0
        %798 = vmatprep.subr.bf16.mxu0 0
        %799 = vmatpush2.bf16.msra.mxu0 0
        %800 = vmatprep.subr.bf16.mxu0 0
        %801 = vmatpush2.bf16.msra.mxu0 0
        %802 = vmatprep.subr.bf16.mxu0 0
        %803 = vmatpush2.bf16.msra.mxu0 0
        %804 = vmatprep.subr.bf16.mxu0 0
        %805 = vmatpush2.bf16.msra.mxu0 0
        %806 = vmatprep.subr.bf16.mxu0 0
        %807 = vmatpush2.bf16.msra.mxu0 0
        %808 = vmatprep.subr.bf16.mxu0 0
        %809 = vmatpush2.bf16.msra.mxu0 0
        %810 = vmatprep.mubr.bf16.mxu0 0
        %811 = vmatmul.mubr.bf16.gmra.mxu0 %v766
        %v812 = vpop.f32.mrf.mxu0
        %v813 = vadd.f32 0.0, %v812
        %v814 = vpop.f32.mrf.mxu0
        %v815 = vpop.f32.mrf.mxu0
        %v816 = vadd.f32 0.0, %v815
        %v817 = vpop.f32.mrf.mxu0
        %818 = vmatprep.mubr.bf16.mxu0 0
        %819 = vmatmul.mubr.bf16.gmra.mxu0 %v769
        %v820 = vpop.f32.mrf.mxu0
        %v821 = vadd.f32 0.0, %v820
        %v822 = vpop.f32.mrf.mxu0
        %v823 = vpop.f32.mrf.mxu0
        %v824 = vadd.f32 0.0, %v823
        %v825 = vpop.f32.mrf.mxu0
        %826 = vmatprep.mubr.bf16.mxu0 0
        %827 = vmatmul.mubr.bf16.gmra.mxu0 %v772
        %v828 = vpop.f32.mrf.mxu0
        %v829 = vadd.f32 0.0, %v828
        %v830 = vpop.f32.mrf.mxu0
        %v831 = vpop.f32.mrf.mxu0
        %v832 = vadd.f32 0.0, %v831
        %v833 = vpop.f32.mrf.mxu0
        %834 = vdwg.mxu0
        %v835 = vld [vmem:[%s7] sm:$0xff]
        %v836 = vld [vmem:[%s7 + $0x8] sm:$0xff]
        %v837 = vld [vmem:[%s7 + $0x10] sm:$0xff]
        %v838 = vld [vmem:[%s7 + $0x18] sm:$0xff]
        %v839 = vld [vmem:[%s7 + $0x20] sm:$0xff]
        %v840 = vld [vmem:[%s7 + $0x28] sm:$0xff]
        %842 = vset.pattern.permute.xlu0 0
        %843 = vperm.xlu0 %842, %v835
        %v844 = vpop.permute.xlu0 %843
        %847 = vset.pattern.permute.xlu0 0
        %848 = vperm.xlu0 %847, %v836
        %v849 = vpop.permute.xlu0 %848
        %852 = vset.pattern.permute.xlu0 0
        %853 = vperm.xlu0 %852, %v837
        %v854 = vpop.permute.xlu0 %853
        %857 = vset.pattern.permute.xlu0 0
        %858 = vperm.xlu0 %857, %v838
        %v859 = vpop.permute.xlu0 %858
        %862 = vset.pattern.permute.xlu0 0
        %863 = vperm.xlu0 %862, %v839
        %v864 = vpop.permute.xlu0 %863
        %867 = vset.pattern.permute.xlu0 0
        %868 = vperm.xlu0 %867, %v840
        %v869 = vpop.permute.xlu0 %868
        %v871 = vmul.f32 %v813, %v844
        %v872 = vmul.f32 %v816, %v849
        %v873 = vmul.f32 %v821, %v854
        %v874 = vmul.f32 %v824, %v859
        %v875 = vmul.f32 %v829, %v864
        %v876 = vmul.f32 %v832, %v869
        %877 = vst [vmem:[#allocation2] sm:$0xff] %v871
        %878 = vst [vmem:[#allocation2 + $0x8] sm:$0xff] %v872
        %879 = vst [vmem:[#allocation2 + $0x10] sm:$0xff] %v873
        %880 = vst [vmem:[#allocation2 + $0x18] sm:$0xff] %v874
        %881 = vst [vmem:[#allocation2 + $0x20] sm:$0xff] %v875
        %882 = vst [vmem:[#allocation2 + $0x28] sm:$0xff] %v876
        %v883 = vld [vmem:[%s10] sm:$0xf]
        %v884 = vld [vmem:[%s10 + $0x4] sm:$0xf]
        %v885 = vld [vmem:[%s10 + $0x8] sm:$0xf]
        %v886 = vpack.c.bf16 %v872, %v871
        %v887 = vpack.c.bf16 %v874, %v873
        %v888 = vpack.c.bf16 %v876, %v875
        %v892 = vunpack.c.l.b16 %v883
        %v893 = vunpack.c.l.b16 %v884
        %v894 = vunpack.c.l.b16 %v885
        %v895 = vpack.c.b16 %v893, %v892
        %v896 = vpack.c.b16 %v894, %v894
        %v898 = vsel %vm641, %v895, 0
        %v901 = vsel %vm641, %v896, 0
        %903 = vmatprep.subr.bf16.mxu0 0
        %904 = vmatpush1.bf16.msra.mxu0 0
        %905 = vmatprep.subr.bf16.mxu0 0
        %906 = vmatpush1.bf16.msra.mxu0 0
        %907 = vmatprep.subr.bf16.mxu0 0
        %908 = vmatpush1.bf16.msra.mxu0 0
        %909 = vmatprep.subr.bf16.mxu0 0
        %910 = vmatpush1.bf16.msra.mxu0 0
        %911 = vmatprep.subr.bf16.mxu0 0
        %912 = vmatpush1.bf16.msra.mxu0 0
        %913 = vmatprep.subr.bf16.mxu0 0
        %914 = vmatpush1.bf16.msra.mxu0 %v888
        %915 = vmatprep.subr.bf16.mxu0 0
        %916 = vmatpush1.bf16.msra.mxu0 %v887
        %917 = vmatprep.subr.bf16.mxu0 0
        %918 = vmatpush1.bf16.msra.mxu0 %v886
        %919 = vmatprep.subr.bf16.mxu0 0
        %920 = vmatpush2.bf16.msra.mxu0 0
        %921 = vmatprep.subr.bf16.mxu0 0
        %922 = vmatpush2.bf16.msra.mxu0 0
        %923 = vmatprep.subr.bf16.mxu0 0
        %924 = vmatpush2.bf16.msra.mxu0 0
        %925 = vmatprep.subr.bf16.mxu0 0
        %926 = vmatpush2.bf16.msra.mxu0 0
        %927 = vmatprep.subr.bf16.mxu0 0
        %928 = vmatpush2.bf16.msra.mxu0 0
        %929 = vmatprep.subr.bf16.mxu0 0
        %930 = vmatpush2.bf16.msra.mxu0 0
        %931 = vmatprep.subr.bf16.mxu0 0
        %932 = vmatpush2.bf16.msra.mxu0 0
        %933 = vmatprep.subr.bf16.mxu0 0
        %934 = vmatpush2.bf16.msra.mxu0 0
        %935 = vmatprep.mubr.bf16.mxu0 0
        %936 = vmatmul.mubr.bf16.gmra.mxu0 %v898
        %v937 = vpop.f32.mrf.mxu0
        %v938 = vadd.f32 0.0, %v937
        %v939 = vpop.f32.mrf.mxu0
        %v940 = vpop.f32.mrf.mxu0
        %v941 = vadd.f32 0.0, %v940
        %v942 = vpop.f32.mrf.mxu0
        %943 = vmatprep.mubr.bf16.mxu0 0
        %944 = vmatmul.mubr.bf16.gmra.mxu0 %v901
        %v945 = vpop.f32.mrf.mxu0
        %v946 = vadd.f32 0.0, %v945
        %v947 = vpop.f32.mrf.mxu0
        %v948 = vpop.f32.mrf.mxu0
        %v949 = vpop.f32.mrf.mxu0
        %950 = vdwg.mxu0
        %v951 = vld [vmem:[%s12] sm:$0xff]
        %v952 = vld [vmem:[%s12 + $0x8] sm:$0xff]
        %v953 = vld [vmem:[%s12 + $0x10] sm:$0xff]
        %955 = vset.pattern.permute.xlu0 0
        %956 = vperm.xlu0 %955, %v951
        %v957 = vpop.permute.xlu0 %956
        %960 = vset.pattern.permute.xlu0 0
        %961 = vperm.xlu0 %960, %v952
        %v962 = vpop.permute.xlu0 %961
        %965 = vset.pattern.permute.xlu0 0
        %966 = vperm.xlu0 %965, %v953
        %v967 = vpop.permute.xlu0 %966
        %v969 = vmul.f32 %v938, %v957
        %v970 = vmul.f32 %v941, %v962
        %v971 = vmul.f32 %v946, %v967
        %v972 = vmax.f32 %v969, 0.0
        %v973 = vmax.f32 %v970, 0.0
        %v974 = vmax.f32 %v971, 0.0
        %v975 = vld [vmem:[%s2] sm:$0xf]
        %v976 = vld [vmem:[%s2 + $0x4] sm:$0xf]
        %v977 = vld [vmem:[%s2 + $0x8] sm:$0xf]
        %v978 = vld [vmem:[%s2 + $0xc] sm:$0xf]
        %v979 = vld [vmem:[%s2 + $0x10] sm:$0xf]
        %v980 = vpack.c.bf16 %v973, %v972
        %v981 = vpack.c.bf16 %v974, %v974
        %v987 = vunpack.c.l.b16 %v975
        %v988 = vunpack.c.l.b16 %v976
        %v989 = vunpack.c.l.b16 %v977
        %v990 = vunpack.c.l.b16 %v978
        %v991 = vunpack.c.l.b16 %v979
        %v992 = vpack.c.b16 %v988, %v987
        %v993 = vpack.c.b16 %v990, %v989
        %v994 = vpack.c.b16 %v991, %v991
        %vm995 = vcmask 195584
        %v997 = vsel %vm995, %v992, 0
        %v1000 = vsel %vm995, %v993, 0
        %v1003 = vsel %vm995, %v994, 0
        %v1006 = vsel %vm774, %v981, 0
        %1008 = vmatprep.subr.bf16.mxu0 0
        %1009 = vmatpush1.bf16.msra.mxu0 0
        %1010 = vmatprep.subr.bf16.mxu0 0
        %1011 = vmatpush1.bf16.msra.mxu0 0
        %1012 = vmatprep.subr.bf16.mxu0 0
        %1013 = vmatpush1.bf16.msra.mxu0 0
        %1014 = vmatprep.subr.bf16.mxu0 0
        %1015 = vmatpush1.bf16.msra.mxu0 0
        %1016 = vmatprep.subr.bf16.mxu0 0
        %1017 = vmatpush1.bf16.msra.mxu0 0
        %1018 = vmatprep.subr.bf16.mxu0 0
        %1019 = vmatpush1.bf16.msra.mxu0 0
        %1020 = vmatprep.subr.bf16.mxu0 0
        %1021 = vmatpush1.bf16.msra.mxu0 %v1006
        %1022 = vmatprep.subr.bf16.mxu0 0
        %1023 = vmatpush1.bf16.msra.mxu0 %v980
        %1024 = vmatprep.subr.bf16.mxu0 0
        %1025 = vmatpush2.bf16.msra.mxu0 0
        %1026 = vmatprep.subr.bf16.mxu0 0
        %1027 = vmatpush2.bf16.msra.mxu0 0
        %1028 = vmatprep.subr.bf16.mxu0 0
        %1029 = vmatpush2.bf16.msra.mxu0 0
        %1030 = vmatprep.subr.bf16.mxu0 0
        %1031 = vmatpush2.bf16.msra.mxu0 0
        %1032 = vmatprep.subr.bf16.mxu0 0
        %1033 = vmatpush2.bf16.msra.mxu0 0
        %1034 = vmatprep.subr.bf16.mxu0 0
        %1035 = vmatpush2.bf16.msra.mxu0 0
        %1036 = vmatprep.subr.bf16.mxu0 0
        %1037 = vmatpush2.bf16.msra.mxu0 0
        %1038 = vmatprep.subr.bf16.mxu0 0
        %1039 = vmatpush2.bf16.msra.mxu0 0
        %1040 = vmatprep.mubr.bf16.mxu0 0
        %1041 = vmatmul.mubr.bf16.gmra.mxu0 %v997
        %v1042 = vpop.f32.mrf.mxu0
        %v1043 = vadd.f32 0.0, %v1042
        %v1044 = vpop.f32.mrf.mxu0
        %v1045 = vpop.f32.mrf.mxu0
        %v1046 = vadd.f32 0.0, %v1045
        %v1047 = vpop.f32.mrf.mxu0
        %1048 = vmatprep.mubr.bf16.mxu0 0
        %1049 = vmatmul.mubr.bf16.gmra.mxu0 %v1000
        %v1050 = vpop.f32.mrf.mxu0
        %v1051 = vadd.f32 0.0, %v1050
        %v1052 = vpop.f32.mrf.mxu0
        %v1053 = vpop.f32.mrf.mxu0
        %v1054 = vadd.f32 0.0, %v1053
        %v1055 = vpop.f32.mrf.mxu0
        %1056 = vmatprep.mubr.bf16.mxu0 0
        %1057 = vmatmul.mubr.bf16.gmra.mxu0 %v1003
        %v1058 = vpop.f32.mrf.mxu0
        %v1059 = vadd.f32 0.0, %v1058
        %v1060 = vpop.f32.mrf.mxu0
        %v1061 = vpop.f32.mrf.mxu0
        %v1062 = vpop.f32.mrf.mxu0
        %1063 = vdwg.mxu0
        %v1064 = vld [vmem:[%s5] sm:$0xff]
        %v1065 = vld [vmem:[%s5 + $0x8] sm:$0xff]
        %v1066 = vld [vmem:[%s5 + $0x10] sm:$0xff]
        %v1067 = vld [vmem:[%s5 + $0x18] sm:$0xff]
        %v1068 = vld [vmem:[%s5 + $0x20] sm:$0xff]
        %1070 = vset.pattern.permute.xlu0 0
        %1071 = vperm.xlu0 %1070, %v1064
        %v1072 = vpop.permute.xlu0 %1071
        %1075 = vset.pattern.permute.xlu0 0
        %1076 = vperm.xlu0 %1075, %v1065
        %v1077 = vpop.permute.xlu0 %1076
        %1080 = vset.pattern.permute.xlu0 0
        %1081 = vperm.xlu0 %1080, %v1066
        %v1082 = vpop.permute.xlu0 %1081
        %1085 = vset.pattern.permute.xlu0 0
        %1086 = vperm.xlu0 %1085, %v1067
        %v1087 = vpop.permute.xlu0 %1086
        %1090 = vset.pattern.permute.xlu0 0
        %1091 = vperm.xlu0 %1090, %v1068
        %v1092 = vpop.permute.xlu0 %1091
        %v1094 = vmul.f32 %v1043, %v1072
        %v1095 = vmul.f32 %v1046, %v1077
        %v1096 = vmul.f32 %v1051, %v1082
        %v1097 = vmul.f32 %v1054, %v1087
        %v1098 = vmul.f32 %v1059, %v1092
        %v1099 = vpack.c.bf16 %v1095, %v1094
        %v1100 = vpack.c.bf16 %v1097, %v1096
        %v1101 = vpack.c.bf16 %v1098, %v1098
        %1105 = vxpose.xlu0.c.b16.start [1/8] %v992, 128
        %1106 = vxpose.xlu0.c.b16.cont [2/8] %v993, 128
        %1107 = vxpose.xlu0.c.b16.cont [3/8] %v994, 128
        %1108 = vxpose.xlu0.c.b16.cont [4/8] 0, 128
        %1109 = vxpose.xlu0.c.b16.cont [5/8] 0, 128
        %1110 = vxpose.xlu0.c.b16.cont [6/8] 0, 128
        %1111 = vxpose.xlu0.c.b16.cont [7/8] 0, 128
        %1112 = vxpose.xlu0.c.b16.end [8/8] 0, 128
        %v1113 = vpop.trf.xlu0
        %v1114 = vpop.trf.xlu0
        %v1115 = vpop.trf.xlu0
        %v1116 = vpop.trf.xlu0
        %v1117 = vpop.trf.xlu0
        %v1118 = vpop.trf.xlu0
        %v1119 = vpop.trf.xlu0
        %v1120 = vpop.trf.xlu0
        %v1122 = vsel %vm764, %v1113, 0
        %v1125 = vsel %vm764, %v1114, 0
        %v1128 = vsel %vm774, %v1101, 0
        %1130 = vmatprep.subr.bf16.mxu0 0
        %1131 = vmatpush1.bf16.msra.mxu0 0
        %1132 = vmatprep.subr.bf16.mxu0 0
        %1133 = vmatpush1.bf16.msra.mxu0 0
        %1134 = vmatprep.subr.bf16.mxu0 0
        %1135 = vmatpush1.bf16.msra.mxu0 0
        %1136 = vmatprep.subr.bf16.mxu0 0
        %1137 = vmatpush1.bf16.msra.mxu0 0
        %1138 = vmatprep.subr.bf16.mxu0 0
        %1139 = vmatpush1.bf16.msra.mxu0 0
        %1140 = vmatprep.subr.bf16.mxu0 0
        %1141 = vmatpush1.bf16.msra.mxu0 %v1128
        %1142 = vmatprep.subr.bf16.mxu0 0
        %1143 = vmatpush1.bf16.msra.mxu0 %v1100
        %1144 = vmatprep.subr.bf16.mxu0 0
        %1145 = vmatpush1.bf16.msra.mxu0 %v1099
        %1146 = vmatprep.subr.bf16.mxu0 0
        %1147 = vmatpush2.bf16.msra.mxu0 0
        %1148 = vmatprep.subr.bf16.mxu0 0
        %1149 = vmatpush2.bf16.msra.mxu0 0
        %1150 = vmatprep.subr.bf16.mxu0 0
        %1151 = vmatpush2.bf16.msra.mxu0 0
        %1152 = vmatprep.subr.bf16.mxu0 0
        %1153 = vmatpush2.bf16.msra.mxu0 0
        %1154 = vmatprep.subr.bf16.mxu0 0
        %1155 = vmatpush2.bf16.msra.mxu0 0
        %1156 = vmatprep.subr.bf16.mxu0 0
        %1157 = vmatpush2.bf16.msra.mxu0 0
        %1158 = vmatprep.subr.bf16.mxu0 0
        %1159 = vmatpush2.bf16.msra.mxu0 0
        %1160 = vmatprep.subr.bf16.mxu0 0
        %1161 = vmatpush2.bf16.msra.mxu0 0
        %1162 = vmatprep.mubr.bf16.mxu0 0
        %1163 = vmatmul.mubr.bf16.gmra.mxu0 %v1122
        %v1164 = vpop.f32.mrf.mxu0
        %v1165 = vadd.f32 0.0, %v1164
        %v1166 = vpop.f32.mrf.mxu0
        %v1167 = vpop.f32.mrf.mxu0
        %v1168 = vadd.f32 0.0, %v1167
        %v1169 = vpop.f32.mrf.mxu0
        %1170 = vmatprep.mubr.bf16.mxu0 0
        %1171 = vmatmul.mubr.bf16.gmra.mxu0 %v1125
        %v1172 = vpop.f32.mrf.mxu0
        %v1173 = vadd.f32 0.0, %v1172
        %v1174 = vpop.f32.mrf.mxu0
        %v1175 = vpop.f32.mrf.mxu0
        %v1176 = vpop.f32.mrf.mxu0
        %1177 = vdwg.mxu0
        %v1178 = vld [vmem:[%s8] sm:$0xff]
        %v1179 = vld [vmem:[%s8 + $0x8] sm:$0xff]
        %v1180 = vld [vmem:[%s8 + $0x10] sm:$0xff]
        %1182 = vset.pattern.permute.xlu0 0
        %1183 = vperm.xlu0 %1182, %v1178
        %v1184 = vpop.permute.xlu0 %1183
        %1187 = vset.pattern.permute.xlu0 0
        %1188 = vperm.xlu0 %1187, %v1179
        %v1189 = vpop.permute.xlu0 %1188
        %1192 = vset.pattern.permute.xlu0 0
        %1193 = vperm.xlu0 %1192, %v1180
        %v1194 = vpop.permute.xlu0 %1193
        %v1196 = vmul.f32 %v1165, %v1184
        %v1197 = vmul.f32 %v1168, %v1189
        %v1198 = vmul.f32 %v1173, %v1194
        %1199 = vst [vmem:[#allocation3] sm:$0xff] %v1196
        %1200 = vst [vmem:[#allocation3 + $0x8] sm:$0xff] %v1197
        %1201 = vst [vmem:[#allocation3 + $0x10] sm:$0xff] %v1198
        %v1202 = vld [vmem:[%s11] sm:$0xf]
        %v1203 = vld [vmem:[%s11 + $0x4] sm:$0xf]
        %v1204 = vpack.c.bf16 %v1197, %v1196
        %v1205 = vpack.c.bf16 %v1198, %v1198
        %v1208 = vunpack.c.l.b16 %v1202
        %v1209 = vunpack.c.l.b16 %v1203
        %v1210 = vpack.c.b16 %v1209, %v1208
        %v1212 = vsel %vm995, %v1210, 0
        %v1215 = vsel %vm774, %v1205, 0
        %1217 = vmatprep.subr.bf16.mxu0 0
        %1218 = vmatpush1.bf16.msra.mxu0 0
        %1219 = vmatprep.subr.bf16.mxu0 0
        %1220 = vmatpush1.bf16.msra.mxu0 0
        %1221 = vmatprep.subr.bf16.mxu0 0
        %1222 = vmatpush1.bf16.msra.mxu0 0
        %1223 = vmatprep.subr.bf16.mxu0 0
        %1224 = vmatpush1.bf16.msra.mxu0 0
        %1225 = vmatprep.subr.bf16.mxu0 0
        %1226 = vmatpush1.bf16.msra.mxu0 0
        %1227 = vmatprep.subr.bf16.mxu0 0
        %1228 = vmatpush1.bf16.msra.mxu0 0
        %1229 = vmatprep.subr.bf16.mxu0 0
        %1230 = vmatpush1.bf16.msra.mxu0 %v1215
        %1231 = vmatprep.subr.bf16.mxu0 0
        %1232 = vmatpush1.bf16.msra.mxu0 %v1204
        %1233 = vmatprep.subr.bf16.mxu0 0
        %1234 = vmatpush2.bf16.msra.mxu0 0
        %1235 = vmatprep.subr.bf16.mxu0 0
        %1236 = vmatpush2.bf16.msra.mxu0 0
        %1237 = vmatprep.subr.bf16.mxu0 0
        %1238 = vmatpush2.bf16.msra.mxu0 0
        %1239 = vmatprep.subr.bf16.mxu0 0
        %1240 = vmatpush2.bf16.msra.mxu0 0
        %1241 = vmatprep.subr.bf16.mxu0 0
        %1242 = vmatpush2.bf16.msra.mxu0 0
        %1243 = vmatprep.subr.bf16.mxu0 0
        %1244 = vmatpush2.bf16.msra.mxu0 0
        %1245 = vmatprep.subr.bf16.mxu0 0
        %1246 = vmatpush2.bf16.msra.mxu0 0
        %1247 = vmatprep.subr.bf16.mxu0 0
        %1248 = vmatpush2.bf16.msra.mxu0 0
        %1249 = vmatprep.mubr.bf16.mxu0 0
        %1250 = vmatmul.mubr.bf16.gmra.mxu0 %v1212
        %v1251 = vpop.f32.mrf.mxu0
        %v1252 = vadd.f32 0.0, %v1251
        %v1253 = vpop.f32.mrf.mxu0
        %v1254 = vpop.f32.mrf.mxu0
        %v1255 = vadd.f32 0.0, %v1254
        %v1256 = vpop.f32.mrf.mxu0
        %1257 = vdwg.mxu0
        %v1258 = vld [vmem:[%s13] sm:$0xff]
        %v1259 = vld [vmem:[%s13 + $0x8] sm:$0xff]
        %1261 = vset.pattern.permute.xlu0 0
        %1262 = vperm.xlu0 %1261, %v1258
        %v1263 = vpop.permute.xlu0 %1262
        %1266 = vset.pattern.permute.xlu0 0
        %1267 = vperm.xlu0 %1266, %v1259
        %v1268 = vpop.permute.xlu0 %1267
        %v1270 = vmul.f32 %v1252, %v1263
        %v1271 = vmul.f32 %v1255, %v1268
        %v1272 = vmax.f32 %v1270, 0.0
        %v1273 = vmax.f32 %v1271, 0.0
        %v1274 = vld [vmem:[%s3] sm:$0xf]
        %v1275 = vld [vmem:[%s3 + $0x4] sm:$0xf]
        %v1276 = vld [vmem:[%s3 + $0x8] sm:$0xf]
        %v1277 = vld [vmem:[%s3 + $0xc] sm:$0xf]
        %v1278 = vld [vmem:[%s3 + $0x10] sm:$0xf]
        %v1279 = vpack.c.bf16 %v1273, %v1272
        %v1285 = vunpack.c.l.b16 %v1274
        %v1286 = vunpack.c.l.b16 %v1275
        %v1287 = vunpack.c.l.b16 %v1276
        %v1288 = vunpack.c.l.b16 %v1277
        %v1289 = vunpack.c.l.b16 %v1278
        %v1290 = vpack.c.b16 %v1286, %v1285
        %v1291 = vpack.c.b16 %v1288, %v1287
        %v1292 = vpack.c.b16 %v1289, %v1289
        %vm1293 = vcmask 130048
        %v1295 = vsel %vm1293, %v1290, 0
        %v1298 = vsel %vm1293, %v1291, 0
        %v1301 = vsel %vm1293, %v1292, 0
        %1303 = vmatprep.subr.bf16.mxu0 0
        %1304 = vmatpush1.bf16.msra.mxu0 0
        %1305 = vmatprep.subr.bf16.mxu0 0
        %1306 = vmatpush1.bf16.msra.mxu0 0
        %1307 = vmatprep.subr.bf16.mxu0 0
        %1308 = vmatpush1.bf16.msra.mxu0 0
        %1309 = vmatprep.subr.bf16.mxu0 0
        %1310 = vmatpush1.bf16.msra.mxu0 0
        %1311 = vmatprep.subr.bf16.mxu0 0
        %1312 = vmatpush1.bf16.msra.mxu0 0
        %1313 = vmatprep.subr.bf16.mxu0 0
        %1314 = vmatpush1.bf16.msra.mxu0 0
        %1315 = vmatprep.subr.bf16.mxu0 0
        %1316 = vmatpush1.bf16.msra.mxu0 0
        %1317 = vmatprep.subr.bf16.mxu0 0
        %1318 = vmatpush1.bf16.msra.mxu0 %v1279
        %1319 = vmatprep.subr.bf16.mxu0 0
        %1320 = vmatpush2.bf16.msra.mxu0 0
        %1321 = vmatprep.subr.bf16.mxu0 0
        %1322 = vmatpush2.bf16.msra.mxu0 0
        %1323 = vmatprep.subr.bf16.mxu0 0
        %1324 = vmatpush2.bf16.msra.mxu0 0
        %1325 = vmatprep.subr.bf16.mxu0 0
        %1326 = vmatpush2.bf16.msra.mxu0 0
        %1327 = vmatprep.subr.bf16.mxu0 0
        %1328 = vmatpush2.bf16.msra.mxu0 0
        %1329 = vmatprep.subr.bf16.mxu0 0
        %1330 = vmatpush2.bf16.msra.mxu0 0
        %1331 = vmatprep.subr.bf16.mxu0 0
        %1332 = vmatpush2.bf16.msra.mxu0 0
        %1333 = vmatprep.subr.bf16.mxu0 0
        %1334 = vmatpush2.bf16.msra.mxu0 0
        %1335 = vmatprep.mubr.bf16.mxu0 0
        %1336 = vmatmul.mubr.bf16.gmra.mxu0 %v1295
        %v1337 = vpop.f32.mrf.mxu0
        %v1338 = vadd.f32 0.0, %v1337
        %v1339 = vpop.f32.mrf.mxu0
        %v1340 = vpop.f32.mrf.mxu0
        %v1341 = vadd.f32 0.0, %v1340
        %v1342 = vpop.f32.mrf.mxu0
        %1343 = vmatprep.mubr.bf16.mxu0 0
        %1344 = vmatmul.mubr.bf16.gmra.mxu0 %v1298
        %v1345 = vpop.f32.mrf.mxu0
        %v1346 = vadd.f32 0.0, %v1345
        %v1347 = vpop.f32.mrf.mxu0
        %v1348 = vpop.f32.mrf.mxu0
        %v1349 = vadd.f32 0.0, %v1348
        %v1350 = vpop.f32.mrf.mxu0
        %1351 = vmatprep.mubr.bf16.mxu0 0
        %1352 = vmatmul.mubr.bf16.gmra.mxu0 %v1301
        %v1353 = vpop.f32.mrf.mxu0
        %v1354 = vadd.f32 0.0, %v1353
        %v1355 = vpop.f32.mrf.mxu0
        %v1356 = vpop.f32.mrf.mxu0
        %v1357 = vpop.f32.mrf.mxu0
        %1358 = vdwg.mxu0
        %v1359 = vld [vmem:[%s6] sm:$0xff]
        %v1360 = vld [vmem:[%s6 + $0x8] sm:$0xff]
        %v1361 = vld [vmem:[%s6 + $0x10] sm:$0xff]
        %v1362 = vld [vmem:[%s6 + $0x18] sm:$0xff]
        %v1363 = vld [vmem:[%s6 + $0x20] sm:$0xff]
        %1365 = vset.pattern.permute.xlu0 0
        %1366 = vperm.xlu0 %1365, %v1359
        %v1367 = vpop.permute.xlu0 %1366
        %1370 = vset.pattern.permute.xlu0 0
        %1371 = vperm.xlu0 %1370, %v1360
        %v1372 = vpop.permute.xlu0 %1371
        %1375 = vset.pattern.permute.xlu0 0
        %1376 = vperm.xlu0 %1375, %v1361
        %v1377 = vpop.permute.xlu0 %1376
        %1380 = vset.pattern.permute.xlu0 0
        %1381 = vperm.xlu0 %1380, %v1362
        %v1382 = vpop.permute.xlu0 %1381
        %1385 = vset.pattern.permute.xlu0 0
        %1386 = vperm.xlu0 %1385, %v1363
        %v1387 = vpop.permute.xlu0 %1386
        %v1389 = vmul.f32 %v1338, %v1367
        %v1390 = vmul.f32 %v1341, %v1372
        %v1391 = vmul.f32 %v1346, %v1377
        %v1392 = vmul.f32 %v1349, %v1382
        %v1393 = vmul.f32 %v1354, %v1387
        %v1394 = vpack.c.bf16 %v1390, %v1389
        %v1395 = vpack.c.bf16 %v1392, %v1391
        %v1396 = vpack.c.bf16 %v1393, %v1393
        %1400 = vxpose.xlu0.c.b16.start [1/8] %v1290, 128
        %1401 = vxpose.xlu0.c.b16.cont [2/8] %v1291, 128
        %1402 = vxpose.xlu0.c.b16.cont [3/8] %v1292, 128
        %1403 = vxpose.xlu0.c.b16.cont [4/8] 0, 128
        %1404 = vxpose.xlu0.c.b16.cont [5/8] 0, 128
        %1405 = vxpose.xlu0.c.b16.cont [6/8] 0, 128
        %1406 = vxpose.xlu0.c.b16.cont [7/8] 0, 128
        %1407 = vxpose.xlu0.c.b16.end [8/8] 0, 128
        %v1408 = vpop.trf.xlu0
        %v1409 = vpop.trf.xlu0
        %v1410 = vpop.trf.xlu0
        %v1411 = vpop.trf.xlu0
        %v1412 = vpop.trf.xlu0
        %v1413 = vpop.trf.xlu0
        %v1414 = vpop.trf.xlu0
        %v1415 = vpop.trf.xlu0
        %v1417 = vsel %vm764, %v1408, 0
        %v1420 = vsel %vm774, %v1396, 0
        %1422 = vmatprep.subr.bf16.mxu0 0
        %1423 = vmatpush1.bf16.msra.mxu0 0
        %1424 = vmatprep.subr.bf16.mxu0 0
        %1425 = vmatpush1.bf16.msra.mxu0 0
        %1426 = vmatprep.subr.bf16.mxu0 0
        %1427 = vmatpush1.bf16.msra.mxu0 0
        %1428 = vmatprep.subr.bf16.mxu0 0
        %1429 = vmatpush1.bf16.msra.mxu0 0
        %1430 = vmatprep.subr.bf16.mxu0 0
        %1431 = vmatpush1.bf16.msra.mxu0 0
        %1432 = vmatprep.subr.bf16.mxu0 0
        %1433 = vmatpush1.bf16.msra.mxu0 %v1420
        %1434 = vmatprep.subr.bf16.mxu0 0
        %1435 = vmatpush1.bf16.msra.mxu0 %v1395
        %1436 = vmatprep.subr.bf16.mxu0 0
        %1437 = vmatpush1.bf16.msra.mxu0 %v1394
        %1438 = vmatprep.subr.bf16.mxu0 0
        %1439 = vmatpush2.bf16.msra.mxu0 0
        %1440 = vmatprep.subr.bf16.mxu0 0
        %1441 = vmatpush2.bf16.msra.mxu0 0
        %1442 = vmatprep.subr.bf16.mxu0 0
        %1443 = vmatpush2.bf16.msra.mxu0 0
        %1444 = vmatprep.subr.bf16.mxu0 0
        %1445 = vmatpush2.bf16.msra.mxu0 0
        %1446 = vmatprep.subr.bf16.mxu0 0
        %1447 = vmatpush2.bf16.msra.mxu0 0
        %1448 = vmatprep.subr.bf16.mxu0 0
        %1449 = vmatpush2.bf16.msra.mxu0 0
        %1450 = vmatprep.subr.bf16.mxu0 0
        %1451 = vmatpush2.bf16.msra.mxu0 0
        %1452 = vmatprep.subr.bf16.mxu0 0
        %1453 = vmatpush2.bf16.msra.mxu0 0
        %1454 = vmatprep.mubr.bf16.mxu0 0
        %1455 = vmatmul.mubr.bf16.gmra.mxu0 %v1417
        %v1456 = vpop.f32.mrf.mxu0
        %v1457 = vadd.f32 0.0, %v1456
        %v1458 = vpop.f32.mrf.mxu0
        %v1459 = vpop.f32.mrf.mxu0
        %v1460 = vadd.f32 0.0, %v1459
        %v1461 = vpop.f32.mrf.mxu0
        %1462 = vdwg.mxu0
        %v1463 = vld [vmem:[%s9] sm:$0xff]
        %v1464 = vld [vmem:[%s9 + $0x8] sm:$0xff]
        %1466 = vset.pattern.permute.xlu0 0
        %1467 = vperm.xlu0 %1466, %v1463
        %v1468 = vpop.permute.xlu0 %1467
        %1471 = vset.pattern.permute.xlu0 0
        %1472 = vperm.xlu0 %1471, %v1464
        %v1473 = vpop.permute.xlu0 %1472
        %v1475 = vmul.f32 %v1457, %v1468
        %v1476 = vmul.f32 %v1460, %v1473
        %v1477 = vpack.c.bf16 %v1476, %v1475
        %1479 = vxpose.xlu0.c.b16.start [1/8] %v1210, 128
        %1480 = vxpose.xlu0.c.b16.cont [2/8] 0, 128
        %1481 = vxpose.xlu0.c.b16.cont [3/8] 0, 128
        %1482 = vxpose.xlu0.c.b16.cont [4/8] 0, 128
        %1483 = vxpose.xlu0.c.b16.cont [5/8] 0, 128
        %1484 = vxpose.xlu0.c.b16.cont [6/8] 0, 128
        %1485 = vxpose.xlu0.c.b16.cont [7/8] 0, 128
        %1486 = vxpose.xlu0.c.b16.end [8/8] 0, 128
        %v1487 = vpop.trf.xlu0
        %v1488 = vpop.trf.xlu0
        %v1489 = vpop.trf.xlu0
        %v1490 = vpop.trf.xlu0
        %v1491 = vpop.trf.xlu0
        %v1492 = vpop.trf.xlu0
        %v1493 = vpop.trf.xlu0
        %v1494 = vpop.trf.xlu0
        %v1496 = vsel %vm1293, %v1487, 0
        %v1499 = vsel %vm1293, %v1488, 0
        %1501 = vmatprep.subr.bf16.mxu0 0
        %1502 = vmatpush1.bf16.msra.mxu0 0
        %1503 = vmatprep.subr.bf16.mxu0 0
        %1504 = vmatpush1.bf16.msra.mxu0 0
        %1505 = vmatprep.subr.bf16.mxu0 0
        %1506 = vmatpush1.bf16.msra.mxu0 0
        %1507 = vmatprep.subr.bf16.mxu0 0
        %1508 = vmatpush1.bf16.msra.mxu0 0
        %1509 = vmatprep.subr.bf16.mxu0 0
        %1510 = vmatpush1.bf16.msra.mxu0 0
        %1511 = vmatprep.subr.bf16.mxu0 0
        %1512 = vmatpush1.bf16.msra.mxu0 0
        %1513 = vmatprep.subr.bf16.mxu0 0
        %1514 = vmatpush1.bf16.msra.mxu0 0
        %1515 = vmatprep.subr.bf16.mxu0 0
        %1516 = vmatpush1.bf16.msra.mxu0 %v1477
        %1517 = vmatprep.subr.bf16.mxu0 0
        %1518 = vmatpush2.bf16.msra.mxu0 0
        %1519 = vmatprep.subr.bf16.mxu0 0
        %1520 = vmatpush2.bf16.msra.mxu0 0
        %1521 = vmatprep.subr.bf16.mxu0 0
        %1522 = vmatpush2.bf16.msra.mxu0 0
        %1523 = vmatprep.subr.bf16.mxu0 0
        %1524 = vmatpush2.bf16.msra.mxu0 0
        %1525 = vmatprep.subr.bf16.mxu0 0
        %1526 = vmatpush2.bf16.msra.mxu0 0
        %1527 = vmatprep.subr.bf16.mxu0 0
        %1528 = vmatpush2.bf16.msra.mxu0 0
        %1529 = vmatprep.subr.bf16.mxu0 0
        %1530 = vmatpush2.bf16.msra.mxu0 0
        %1531 = vmatprep.subr.bf16.mxu0 0
        %1532 = vmatpush2.bf16.msra.mxu0 0
        %1533 = vmatprep.mubr.bf16.mxu0 0
        %1534 = vmatmul.mubr.bf16.gmra.mxu0 %v1496
        %v1535 = vpop.f32.mrf.mxu0
        %v1536 = vadd.f32 0.0, %v1535
        %v1537 = vpop.f32.mrf.mxu0
        %v1538 = vpop.f32.mrf.mxu0
        %v1539 = vadd.f32 0.0, %v1538
        %v1540 = vpop.f32.mrf.mxu0
        %1541 = vmatprep.mubr.bf16.mxu0 0
        %1542 = vmatmul.mubr.bf16.gmra.mxu0 %v1499
        %v1543 = vpop.f32.mrf.mxu0
        %v1544 = vadd.f32 0.0, %v1543
        %v1545 = vpop.f32.mrf.mxu0
        %v1546 = vpop.f32.mrf.mxu0
        %v1547 = vpop.f32.mrf.mxu0
        %1548 = vdwg.mxu0
        %v1549 = vld [vmem:[%s15] sm:$0xff]
        %v1550 = vld [vmem:[%s15 + $0x8] sm:$0xff]
        %v1551 = vld [vmem:[%s15 + $0x10] sm:$0xff]
        %1553 = vset.pattern.permute.xlu0 0
        %1554 = vperm.xlu0 %1553, %v1549
        %v1555 = vpop.permute.xlu0 %1554
        %1558 = vset.pattern.permute.xlu0 0
        %1559 = vperm.xlu0 %1558, %v1550
        %v1560 = vpop.permute.xlu0 %1559
        %1563 = vset.pattern.permute.xlu0 0
        %1564 = vperm.xlu0 %1563, %v1551
        %v1565 = vpop.permute.xlu0 %1564
        %v1567 = vmul.f32 %v1536, %v1555
        %v1568 = vmul.f32 %v1539, %v1560
        %v1569 = vmul.f32 %v1544, %v1565
        %v1570 = vmax.f32 %v1567, 0.0
        %v1571 = vmax.f32 %v1568, 0.0
        %v1572 = vmax.f32 %v1569, 0.0
        %v1573 = vld [vmem:[#allocation3] sm:$0xff]
        %v1574 = vld [vmem:[#allocation3 + $0x8] sm:$0xff]
        %v1575 = vld [vmem:[#allocation3 + $0x10] sm:$0xff]
        %v1576 = vmul.f32 %v1573, 0.3
        %v1577 = vmul.f32 %v1574, 0.3
        %v1578 = vmul.f32 %v1575, 0.3
        %v1579 = vadd.f32 %v1570, %v1576
        %v1580 = vadd.f32 %v1571, %v1577
        %v1581 = vadd.f32 %v1572, %v1578
        %v1582 = vld [vmem:[%s2] sm:$0xf]
        %v1583 = vld [vmem:[%s2 + $0x4] sm:$0xf]
        %v1584 = vld [vmem:[%s2 + $0x8] sm:$0xf]
        %v1585 = vld [vmem:[%s2 + $0xc] sm:$0xf]
        %v1586 = vld [vmem:[%s2 + $0x10] sm:$0xf]
        %v1587 = vpack.c.bf16 %v1580, %v1579
        %v1588 = vpack.c.bf16 %v1581, %v1581
        %v1594 = vunpack.c.l.b16 %v1582
        %v1595 = vunpack.c.l.b16 %v1583
        %v1596 = vunpack.c.l.b16 %v1584
        %v1597 = vunpack.c.l.b16 %v1585
        %v1598 = vunpack.c.l.b16 %v1586
        %v1599 = vpack.c.b16 %v1595, %v1594
        %v1600 = vpack.c.b16 %v1597, %v1596
        %v1601 = vpack.c.b16 %v1598, %v1598
        %v1603 = vsel %vm995, %v1599, 0
        %v1606 = vsel %vm995, %v1600, 0
        %v1609 = vsel %vm995, %v1601, 0
        %v1612 = vsel %vm774, %v1588, 0
        %1614 = vmatprep.subr.bf16.mxu0 0
        %1615 = vmatpush1.bf16.msra.mxu0 0
        %1616 = vmatprep.subr.bf16.mxu0 0
        %1617 = vmatpush1.bf16.msra.mxu0 0
        %1618 = vmatprep.subr.bf16.mxu0 0
        %1619 = vmatpush1.bf16.msra.mxu0 0
        %1620 = vmatprep.subr.bf16.mxu0 0
        %1621 = vmatpush1.bf16.msra.mxu0 0
        %1622 = vmatprep.subr.bf16.mxu0 0
        %1623 = vmatpush1.bf16.msra.mxu0 0
        %1624 = vmatprep.subr.bf16.mxu0 0
        %1625 = vmatpush1.bf16.msra.mxu0 0
        %1626 = vmatprep.subr.bf16.mxu0 0
        %1627 = vmatpush1.bf16.msra.mxu0 %v1612
        %1628 = vmatprep.subr.bf16.mxu0 0
        %1629 = vmatpush1.bf16.msra.mxu0 %v1587
        %1630 = vmatprep.subr.bf16.mxu0 0
        %1631 = vmatpush2.bf16.msra.mxu0 0
        %1632 = vmatprep.subr.bf16.mxu0 0
        %1633 = vmatpush2.bf16.msra.mxu0 0
        %1634 = vmatprep.subr.bf16.mxu0 0
        %1635 = vmatpush2.bf16.msra.mxu0 0
        %1636 = vmatprep.subr.bf16.mxu0 0
        %1637 = vmatpush2.bf16.msra.mxu0 0
        %1638 = vmatprep.subr.bf16.mxu0 0
        %1639 = vmatpush2.bf16.msra.mxu0 0
        %1640 = vmatprep.subr.bf16.mxu0 0
        %1641 = vmatpush2.bf16.msra.mxu0 0
        %1642 = vmatprep.subr.bf16.mxu0 0
        %1643 = vmatpush2.bf16.msra.mxu0 0
        %1644 = vmatprep.subr.bf16.mxu0 0
        %1645 = vmatpush2.bf16.msra.mxu0 0
        %1646 = vmatprep.mubr.bf16.mxu0 0
        %1647 = vmatmul.mubr.bf16.gmra.mxu0 %v1603
        %v1648 = vpop.f32.mrf.mxu0
        %v1649 = vadd.f32 0.0, %v1648
        %v1650 = vpop.f32.mrf.mxu0
        %v1651 = vpop.f32.mrf.mxu0
        %v1652 = vadd.f32 0.0, %v1651
        %v1653 = vpop.f32.mrf.mxu0
        %1654 = vmatprep.mubr.bf16.mxu0 0
        %1655 = vmatmul.mubr.bf16.gmra.mxu0 %v1606
        %v1656 = vpop.f32.mrf.mxu0
        %v1657 = vadd.f32 0.0, %v1656
        %v1658 = vpop.f32.mrf.mxu0
        %v1659 = vpop.f32.mrf.mxu0
        %v1660 = vadd.f32 0.0, %v1659
        %v1661 = vpop.f32.mrf.mxu0
        %1662 = vmatprep.mubr.bf16.mxu0 0
        %1663 = vmatmul.mubr.bf16.gmra.mxu0 %v1609
        %v1664 = vpop.f32.mrf.mxu0
        %v1665 = vadd.f32 0.0, %v1664
        %v1666 = vpop.f32.mrf.mxu0
        %v1667 = vpop.f32.mrf.mxu0
        %v1668 = vpop.f32.mrf.mxu0
        %1669 = vdwg.mxu0
        %v1670 = vld [vmem:[%s5] sm:$0xff]
        %v1671 = vld [vmem:[%s5 + $0x8] sm:$0xff]
        %v1672 = vld [vmem:[%s5 + $0x10] sm:$0xff]
        %v1673 = vld [vmem:[%s5 + $0x18] sm:$0xff]
        %v1674 = vld [vmem:[%s5 + $0x20] sm:$0xff]
        %1676 = vset.pattern.permute.xlu0 0
        %1677 = vperm.xlu0 %1676, %v1670
        %v1678 = vpop.permute.xlu0 %1677
        %1681 = vset.pattern.permute.xlu0 0
        %1682 = vperm.xlu0 %1681, %v1671
        %v1683 = vpop.permute.xlu0 %1682
        %1686 = vset.pattern.permute.xlu0 0
        %1687 = vperm.xlu0 %1686, %v1672
        %v1688 = vpop.permute.xlu0 %1687
        %1691 = vset.pattern.permute.xlu0 0
        %1692 = vperm.xlu0 %1691, %v1673
        %v1693 = vpop.permute.xlu0 %1692
        %1696 = vset.pattern.permute.xlu0 0
        %1697 = vperm.xlu0 %1696, %v1674
        %v1698 = vpop.permute.xlu0 %1697
        %v1700 = vmul.f32 %v1649, %v1678
        %v1701 = vmul.f32 %v1652, %v1683
        %v1702 = vmul.f32 %v1657, %v1688
        %v1703 = vmul.f32 %v1660, %v1693
        %v1704 = vmul.f32 %v1665, %v1698
        %v1705 = vpack.c.bf16 %v1701, %v1700
        %v1706 = vpack.c.bf16 %v1703, %v1702
        %v1707 = vpack.c.bf16 %v1704, %v1704
        %1711 = vxpose.xlu0.c.b16.start [1/8] %v1599, 128
        %1712 = vxpose.xlu0.c.b16.cont [2/8] %v1600, 128
        %1713 = vxpose.xlu0.c.b16.cont [3/8] %v1601, 128
        %1714 = vxpose.xlu0.c.b16.cont [4/8] 0, 128
        %1715 = vxpose.xlu0.c.b16.cont [5/8] 0, 128
        %1716 = vxpose.xlu0.c.b16.cont [6/8] 0, 128
        %1717 = vxpose.xlu0.c.b16.cont [7/8] 0, 128
        %1718 = vxpose.xlu0.c.b16.end [8/8] 0, 128
        %v1719 = vpop.trf.xlu0
        %v1720 = vpop.trf.xlu0
        %v1721 = vpop.trf.xlu0
        %v1722 = vpop.trf.xlu0
        %v1723 = vpop.trf.xlu0
        %v1724 = vpop.trf.xlu0
        %v1725 = vpop.trf.xlu0
        %v1726 = vpop.trf.xlu0
        %v1728 = vsel %vm764, %v1719, 0
        %v1731 = vsel %vm764, %v1720, 0
        %v1734 = vsel %vm774, %v1707, 0
        %1736 = vmatprep.subr.bf16.mxu0 0
        %1737 = vmatpush1.bf16.msra.mxu0 0
        %1738 = vmatprep.subr.bf16.mxu0 0
        %1739 = vmatpush1.bf16.msra.mxu0 0
        %1740 = vmatprep.subr.bf16.mxu0 0
        %1741 = vmatpush1.bf16.msra.mxu0 0
        %1742 = vmatprep.subr.bf16.mxu0 0
        %1743 = vmatpush1.bf16.msra.mxu0 0
        %1744 = vmatprep.subr.bf16.mxu0 0
        %1745 = vmatpush1.bf16.msra.mxu0 0
        %1746 = vmatprep.subr.bf16.mxu0 0
        %1747 = vmatpush1.bf16.msra.mxu0 %v1734
        %1748 = vmatprep.subr.bf16.mxu0 0
        %1749 = vmatpush1.bf16.msra.mxu0 %v1706
        %1750 = vmatprep.subr.bf16.mxu0 0
        %1751 = vmatpush1.bf16.msra.mxu0 %v1705
        %1752 = vmatprep.subr.bf16.mxu0 0
        %1753 = vmatpush2.bf16.msra.mxu0 0
        %1754 = vmatprep.subr.bf16.mxu0 0
        %1755 = vmatpush2.bf16.msra.mxu0 0
        %1756 = vmatprep.subr.bf16.mxu0 0
        %1757 = vmatpush2.bf16.msra.mxu0 0
        %1758 = vmatprep.subr.bf16.mxu0 0
        %1759 = vmatpush2.bf16.msra.mxu0 0
        %1760 = vmatprep.subr.bf16.mxu0 0
        %1761 = vmatpush2.bf16.msra.mxu0 0
        %1762 = vmatprep.subr.bf16.mxu0 0
        %1763 = vmatpush2.bf16.msra.mxu0 0
        %1764 = vmatprep.subr.bf16.mxu0 0
        %1765 = vmatpush2.bf16.msra.mxu0 0
        %1766 = vmatprep.subr.bf16.mxu0 0
        %1767 = vmatpush2.bf16.msra.mxu0 0
        %1768 = vmatprep.mubr.bf16.mxu0 0
        %1769 = vmatmul.mubr.bf16.gmra.mxu0 %v1728
        %v1770 = vpop.f32.mrf.mxu0
        %v1771 = vadd.f32 0.0, %v1770
        %v1772 = vpop.f32.mrf.mxu0
        %v1773 = vpop.f32.mrf.mxu0
        %v1774 = vadd.f32 0.0, %v1773
        %v1775 = vpop.f32.mrf.mxu0
        %1776 = vmatprep.mubr.bf16.mxu0 0
        %1777 = vmatmul.mubr.bf16.gmra.mxu0 %v1731
        %v1778 = vpop.f32.mrf.mxu0
        %v1779 = vadd.f32 0.0, %v1778
        %v1780 = vpop.f32.mrf.mxu0
        %v1781 = vpop.f32.mrf.mxu0
        %v1782 = vpop.f32.mrf.mxu0
        %1783 = vdwg.mxu0
        %v1784 = vld [vmem:[%s8] sm:$0xff]
        %v1785 = vld [vmem:[%s8 + $0x8] sm:$0xff]
        %v1786 = vld [vmem:[%s8 + $0x10] sm:$0xff]
        %1788 = vset.pattern.permute.xlu0 0
        %1789 = vperm.xlu0 %1788, %v1784
        %v1790 = vpop.permute.xlu0 %1789
        %1793 = vset.pattern.permute.xlu0 0
        %1794 = vperm.xlu0 %1793, %v1785
        %v1795 = vpop.permute.xlu0 %1794
        %1798 = vset.pattern.permute.xlu0 0
        %1799 = vperm.xlu0 %1798, %v1786
        %v1800 = vpop.permute.xlu0 %1799
        %v1802 = vmul.f32 %v1771, %v1790
        %v1803 = vmul.f32 %v1774, %v1795
        %v1804 = vmul.f32 %v1779, %v1800
        %v1805 = vld [vmem:[%s10] sm:$0xf]
        %v1806 = vld [vmem:[%s10 + $0x4] sm:$0xf]
        %v1807 = vld [vmem:[%s10 + $0x8] sm:$0xf]
        %v1808 = vpack.c.bf16 %v1803, %v1802
        %v1809 = vpack.c.bf16 %v1804, %v1804
        %v1813 = vunpack.c.l.b16 %v1805
        %v1814 = vunpack.c.l.b16 %v1806
        %v1815 = vunpack.c.l.b16 %v1807
        %v1816 = vpack.c.b16 %v1814, %v1813
        %v1817 = vpack.c.b16 %v1815, %v1815
        %1820 = vxpose.xlu0.c.b16.start [1/8] %v1816, 128
        %1821 = vxpose.xlu0.c.b16.cont [2/8] %v1817, 128
        %1822 = vxpose.xlu0.c.b16.cont [3/8] 0, 128
        %1823 = vxpose.xlu0.c.b16.cont [4/8] 0, 128
        %1824 = vxpose.xlu0.c.b16.cont [5/8] 0, 128
        %1825 = vxpose.xlu0.c.b16.cont [6/8] 0, 128
        %1826 = vxpose.xlu0.c.b16.cont [7/8] 0, 128
        %1827 = vxpose.xlu0.c.b16.end [8/8] 0, 128
        %v1828 = vpop.trf.xlu0
        %v1829 = vpop.trf.xlu0
        %v1830 = vpop.trf.xlu0
        %v1831 = vpop.trf.xlu0
        %v1832 = vpop.trf.xlu0
        %v1833 = vpop.trf.xlu0
        %v1834 = vpop.trf.xlu0
        %v1835 = vpop.trf.xlu0
        %v1837 = vsel %vm995, %v1828, 0
        %v1840 = vsel %vm995, %v1829, 0
        %v1843 = vsel %vm995, %v1830, 0
        %v1846 = vsel %vm774, %v1809, 0
        %1848 = vmatprep.subr.bf16.mxu0 0
        %1849 = vmatpush1.bf16.msra.mxu0 0
        %1850 = vmatprep.subr.bf16.mxu0 0
        %1851 = vmatpush1.bf16.msra.mxu0 0
        %1852 = vmatprep.subr.bf16.mxu0 0
        %1853 = vmatpush1.bf16.msra.mxu0 0
        %1854 = vmatprep.subr.bf16.mxu0 0
        %1855 = vmatpush1.bf16.msra.mxu0 0
        %1856 = vmatprep.subr.bf16.mxu0 0
        %1857 = vmatpush1.bf16.msra.mxu0 0
        %1858 = vmatprep.subr.bf16.mxu0 0
        %1859 = vmatpush1.bf16.msra.mxu0 0
        %1860 = vmatprep.subr.bf16.mxu0 0
        %1861 = vmatpush1.bf16.msra.mxu0 %v1846
        %1862 = vmatprep.subr.bf16.mxu0 0
        %1863 = vmatpush1.bf16.msra.mxu0 %v1808
        %1864 = vmatprep.subr.bf16.mxu0 0
        %1865 = vmatpush2.bf16.msra.mxu0 0
        %1866 = vmatprep.subr.bf16.mxu0 0
        %1867 = vmatpush2.bf16.msra.mxu0 0
        %1868 = vmatprep.subr.bf16.mxu0 0
        %1869 = vmatpush2.bf16.msra.mxu0 0
        %1870 = vmatprep.subr.bf16.mxu0 0
        %1871 = vmatpush2.bf16.msra.mxu0 0
        %1872 = vmatprep.subr.bf16.mxu0 0
        %1873 = vmatpush2.bf16.msra.mxu0 0
        %1874 = vmatprep.subr.bf16.mxu0 0
        %1875 = vmatpush2.bf16.msra.mxu0 0
        %1876 = vmatprep.subr.bf16.mxu0 0
        %1877 = vmatpush2.bf16.msra.mxu0 0
        %1878 = vmatprep.subr.bf16.mxu0 0
        %1879 = vmatpush2.bf16.msra.mxu0 0
        %1880 = vmatprep.mubr.bf16.mxu0 0
        %1881 = vmatmul.mubr.bf16.gmra.mxu0 %v1837
        %v1882 = vpop.f32.mrf.mxu0
        %v1883 = vadd.f32 0.0, %v1882
        %v1884 = vpop.f32.mrf.mxu0
        %v1885 = vpop.f32.mrf.mxu0
        %v1886 = vadd.f32 0.0, %v1885
        %v1887 = vpop.f32.mrf.mxu0
        %1888 = vmatprep.mubr.bf16.mxu0 0
        %1889 = vmatmul.mubr.bf16.gmra.mxu0 %v1840
        %v1890 = vpop.f32.mrf.mxu0
        %v1891 = vadd.f32 0.0, %v1890
        %v1892 = vpop.f32.mrf.mxu0
        %v1893 = vpop.f32.mrf.mxu0
        %v1894 = vadd.f32 0.0, %v1893
        %v1895 = vpop.f32.mrf.mxu0
        %1896 = vmatprep.mubr.bf16.mxu0 0
        %1897 = vmatmul.mubr.bf16.gmra.mxu0 %v1843
        %v1898 = vpop.f32.mrf.mxu0
        %v1899 = vadd.f32 0.0, %v1898
        %v1900 = vpop.f32.mrf.mxu0
        %v1901 = vpop.f32.mrf.mxu0
        %v1902 = vadd.f32 0.0, %v1901
        %v1903 = vpop.f32.mrf.mxu0
        %1904 = vdwg.mxu0
        %v1905 = vld [vmem:[%s14] sm:$0xff]
        %v1906 = vld [vmem:[%s14 + $0x8] sm:$0xff]
        %v1907 = vld [vmem:[%s14 + $0x10] sm:$0xff]
        %v1908 = vld [vmem:[%s14 + $0x18] sm:$0xff]
        %v1909 = vld [vmem:[%s14 + $0x20] sm:$0xff]
        %v1910 = vld [vmem:[%s14 + $0x28] sm:$0xff]
        %1912 = vset.pattern.permute.xlu0 0
        %1913 = vperm.xlu0 %1912, %v1905
        %v1914 = vpop.permute.xlu0 %1913
        %1917 = vset.pattern.permute.xlu0 0
        %1918 = vperm.xlu0 %1917, %v1906
        %v1919 = vpop.permute.xlu0 %1918
        %1922 = vset.pattern.permute.xlu0 0
        %1923 = vperm.xlu0 %1922, %v1907
        %v1924 = vpop.permute.xlu0 %1923
        %1927 = vset.pattern.permute.xlu0 0
        %1928 = vperm.xlu0 %1927, %v1908
        %v1929 = vpop.permute.xlu0 %1928
        %1932 = vset.pattern.permute.xlu0 0
        %1933 = vperm.xlu0 %1932, %v1909
        %v1934 = vpop.permute.xlu0 %1933
        %1937 = vset.pattern.permute.xlu0 0
        %1938 = vperm.xlu0 %1937, %v1910
        %v1939 = vpop.permute.xlu0 %1938
        %v1941 = vmul.f32 %v1883, %v1914
        %v1942 = vmul.f32 %v1886, %v1919
        %v1943 = vmul.f32 %v1891, %v1924
        %v1944 = vmul.f32 %v1894, %v1929
        %v1945 = vmul.f32 %v1899, %v1934
        %v1946 = vmul.f32 %v1902, %v1939
        %v1947 = vmax.f32 %v1941, 0.0
        %v1948 = vmax.f32 %v1942, 0.0
        %v1949 = vmax.f32 %v1943, 0.0
        %v1950 = vmax.f32 %v1944, 0.0
        %v1951 = vmax.f32 %v1945, 0.0
        %v1952 = vmax.f32 %v1946, 0.0
        %v1953 = vld [vmem:[#allocation2] sm:$0xff]
        %v1954 = vld [vmem:[#allocation2 + $0x8] sm:$0xff]
        %v1955 = vld [vmem:[#allocation2 + $0x10] sm:$0xff]
        %v1956 = vld [vmem:[#allocation2 + $0x18] sm:$0xff]
        %v1957 = vld [vmem:[#allocation2 + $0x20] sm:$0xff]
        %v1958 = vld [vmem:[#allocation2 + $0x28] sm:$0xff]
        %v1959 = vmul.f32 %v1953, 0.3
        %v1960 = vmul.f32 %v1954, 0.3
        %v1961 = vmul.f32 %v1955, 0.3
        %v1962 = vmul.f32 %v1956, 0.3
        %v1963 = vmul.f32 %v1957, 0.3
        %v1964 = vmul.f32 %v1958, 0.3
        %v1965 = vadd.f32 %v1947, %v1959
        %v1966 = vadd.f32 %v1948, %v1960
        %v1967 = vadd.f32 %v1949, %v1961
        %v1968 = vadd.f32 %v1950, %v1962
        %v1969 = vadd.f32 %v1951, %v1963
        %v1970 = vadd.f32 %v1952, %v1964
        %v1971 = vld [vmem:[%s1] sm:$0xf]
        %v1972 = vld [vmem:[%s1 + $0x4] sm:$0xf]
        %v1973 = vld [vmem:[%s1 + $0x8] sm:$0xf]
        %v1974 = vld [vmem:[%s1 + $0xc] sm:$0xf]
        %v1975 = vld [vmem:[%s1 + $0x10] sm:$0xf]
        %v1976 = vpack.c.bf16 %v1966, %v1965
        %v1977 = vpack.c.bf16 %v1968, %v1967
        %v1978 = vpack.c.bf16 %v1970, %v1969
        %v1984 = vunpack.c.l.b16 %v1971
        %v1985 = vunpack.c.l.b16 %v1972
        %v1986 = vunpack.c.l.b16 %v1973
        %v1987 = vunpack.c.l.b16 %v1974
        %v1988 = vunpack.c.l.b16 %v1975
        %v1989 = vpack.c.b16 %v1985, %v1984
        %v1990 = vpack.c.b16 %v1987, %v1986
        %v1991 = vpack.c.b16 %v1988, %v1988
        %v1993 = vsel %vm641, %v1989, 0
        %v1996 = vsel %vm641, %v1990, 0
        %v1999 = vsel %vm641, %v1991, 0
        %2001 = vmatprep.subr.bf16.mxu0 0
        %2002 = vmatpush1.bf16.msra.mxu0 0
        %2003 = vmatprep.subr.bf16.mxu0 0
        %2004 = vmatpush1.bf16.msra.mxu0 0
        %2005 = vmatprep.subr.bf16.mxu0 0
        %2006 = vmatpush1.bf16.msra.mxu0 0
        %2007 = vmatprep.subr.bf16.mxu0 0
        %2008 = vmatpush1.bf16.msra.mxu0 0
        %2009 = vmatprep.subr.bf16.mxu0 0
        %2010 = vmatpush1.bf16.msra.mxu0 0
        %2011 = vmatprep.subr.bf16.mxu0 0
        %2012 = vmatpush1.bf16.msra.mxu0 %v1978
        %2013 = vmatprep.subr.bf16.mxu0 0
        %2014 = vmatpush1.bf16.msra.mxu0 %v1977
        %2015 = vmatprep.subr.bf16.mxu0 0
        %2016 = vmatpush1.bf16.msra.mxu0 %v1976
        %2017 = vmatprep.subr.bf16.mxu0 0
        %2018 = vmatpush2.bf16.msra.mxu0 0
        %2019 = vmatprep.subr.bf16.mxu0 0
        %2020 = vmatpush2.bf16.msra.mxu0 0
        %2021 = vmatprep.subr.bf16.mxu0 0
        %2022 = vmatpush2.bf16.msra.mxu0 0
        %2023 = vmatprep.subr.bf16.mxu0 0
        %2024 = vmatpush2.bf16.msra.mxu0 0
        %2025 = vmatprep.subr.bf16.mxu0 0
        %2026 = vmatpush2.bf16.msra.mxu0 0
        %2027 = vmatprep.subr.bf16.mxu0 0
        %2028 = vmatpush2.bf16.msra.mxu0 0
        %2029 = vmatprep.subr.bf16.mxu0 0
        %2030 = vmatpush2.bf16.msra.mxu0 0
        %2031 = vmatprep.subr.bf16.mxu0 0
        %2032 = vmatpush2.bf16.msra.mxu0 0
        %2033 = vmatprep.mubr.bf16.mxu0 0
        %2034 = vmatmul.mubr.bf16.gmra.mxu0 %v1993
        %v2035 = vpop.f32.mrf.mxu0
        %v2036 = vadd.f32 0.0, %v2035
        %v2037 = vpop.f32.mrf.mxu0
        %v2038 = vpop.f32.mrf.mxu0
        %v2039 = vadd.f32 0.0, %v2038
        %v2040 = vpop.f32.mrf.mxu0
        %2041 = vmatprep.mubr.bf16.mxu0 0
        %2042 = vmatmul.mubr.bf16.gmra.mxu0 %v1996
        %v2043 = vpop.f32.mrf.mxu0
        %v2044 = vadd.f32 0.0, %v2043
        %v2045 = vpop.f32.mrf.mxu0
        %v2046 = vpop.f32.mrf.mxu0
        %v2047 = vadd.f32 0.0, %v2046
        %v2048 = vpop.f32.mrf.mxu0
        %2049 = vmatprep.mubr.bf16.mxu0 0
        %2050 = vmatmul.mubr.bf16.gmra.mxu0 %v1999
        %v2051 = vpop.f32.mrf.mxu0
        %v2052 = vadd.f32 0.0, %v2051
        %v2053 = vpop.f32.mrf.mxu0
        %v2054 = vpop.f32.mrf.mxu0
        %v2055 = vpop.f32.mrf.mxu0
        %2056 = vdwg.mxu0
        %v2057 = vld [vmem:[%s4] sm:$0xff]
        %v2058 = vld [vmem:[%s4 + $0x8] sm:$0xff]
        %v2059 = vld [vmem:[%s4 + $0x10] sm:$0xff]
        %v2060 = vld [vmem:[%s4 + $0x18] sm:$0xff]
        %v2061 = vld [vmem:[%s4 + $0x20] sm:$0xff]
        %2063 = vset.pattern.permute.xlu0 0
        %2064 = vperm.xlu0 %2063, %v2057
        %v2065 = vpop.permute.xlu0 %2064
        %2068 = vset.pattern.permute.xlu0 0
        %2069 = vperm.xlu0 %2068, %v2058
        %v2070 = vpop.permute.xlu0 %2069
        %2073 = vset.pattern.permute.xlu0 0
        %2074 = vperm.xlu0 %2073, %v2059
        %v2075 = vpop.permute.xlu0 %2074
        %2078 = vset.pattern.permute.xlu0 0
        %2079 = vperm.xlu0 %2078, %v2060
        %v2080 = vpop.permute.xlu0 %2079
        %2083 = vset.pattern.permute.xlu0 0
        %2084 = vperm.xlu0 %2083, %v2061
        %v2085 = vpop.permute.xlu0 %2084
        %v2087 = vmul.f32 %v2036, %v2065
        %v2088 = vmul.f32 %v2039, %v2070
        %v2089 = vmul.f32 %v2044, %v2075
        %v2090 = vmul.f32 %v2047, %v2080
        %v2091 = vmul.f32 %v2052, %v2085
        %v2092 = vpack.c.bf16 %v2088, %v2087
        %v2093 = vpack.c.bf16 %v2090, %v2089
        %v2094 = vpack.c.bf16 %v2091, %v2091
        %2098 = vxpose.xlu0.c.b16.start [1/8] %v1989, 128
        %2099 = vxpose.xlu0.c.b16.cont [2/8] %v1990, 128
        %2100 = vxpose.xlu0.c.b16.cont [3/8] %v1991, 128
        %2101 = vxpose.xlu0.c.b16.cont [4/8] 0, 128
        %2102 = vxpose.xlu0.c.b16.cont [5/8] 0, 128
        %2103 = vxpose.xlu0.c.b16.cont [6/8] 0, 128
        %2104 = vxpose.xlu0.c.b16.cont [7/8] 0, 128
        %2105 = vxpose.xlu0.c.b16.end [8/8] 0, 128
        %v2106 = vpop.trf.xlu0
        %v2107 = vpop.trf.xlu0
        %v2108 = vpop.trf.xlu0
        %v2109 = vpop.trf.xlu0
        %v2110 = vpop.trf.xlu0
        %v2111 = vpop.trf.xlu0
        %v2112 = vpop.trf.xlu0
        %v2113 = vpop.trf.xlu0
        %v2115 = vsel %vm764, %v2106, 0
        %v2118 = vsel %vm764, %v2107, 0
        %v2121 = vsel %vm764, %v2108, 0
        %v2124 = vsel %vm774, %v2094, 0
        %2126 = vmatprep.subr.bf16.mxu0 0
        %2127 = vmatpush1.bf16.msra.mxu0 0
        %2128 = vmatprep.subr.bf16.mxu0 0
        %2129 = vmatpush1.bf16.msra.mxu0 0
        %2130 = vmatprep.subr.bf16.mxu0 0
        %2131 = vmatpush1.bf16.msra.mxu0 0
        %2132 = vmatprep.subr.bf16.mxu0 0
        %2133 = vmatpush1.bf16.msra.mxu0 0
        %2134 = vmatprep.subr.bf16.mxu0 0
        %2135 = vmatpush1.bf16.msra.mxu0 0
        %2136 = vmatprep.subr.bf16.mxu0 0
        %2137 = vmatpush1.bf16.msra.mxu0 %v2124
        %2138 = vmatprep.subr.bf16.mxu0 0
        %2139 = vmatpush1.bf16.msra.mxu0 %v2093
        %2140 = vmatprep.subr.bf16.mxu0 0
        %2141 = vmatpush1.bf16.msra.mxu0 %v2092
        %2142 = vmatprep.subr.bf16.mxu0 0
        %2143 = vmatpush2.bf16.msra.mxu0 0
        %2144 = vmatprep.subr.bf16.mxu0 0
        %2145 = vmatpush2.bf16.msra.mxu0 0
        %2146 = vmatprep.subr.bf16.mxu0 0
        %2147 = vmatpush2.bf16.msra.mxu0 0
        %2148 = vmatprep.subr.bf16.mxu0 0
        %2149 = vmatpush2.bf16.msra.mxu0 0
        %2150 = vmatprep.subr.bf16.mxu0 0
        %2151 = vmatpush2.bf16.msra.mxu0 0
        %2152 = vmatprep.subr.bf16.mxu0 0
        %2153 = vmatpush2.bf16.msra.mxu0 0
        %2154 = vmatprep.subr.bf16.mxu0 0
        %2155 = vmatpush2.bf16.msra.mxu0 0
        %2156 = vmatprep.subr.bf16.mxu0 0
        %2157 = vmatpush2.bf16.msra.mxu0 0
        %2158 = vmatprep.mubr.bf16.mxu0 0
        %2159 = vmatmul.mubr.bf16.gmra.mxu0 %v2115
        %v2160 = vpop.f32.mrf.mxu0
        %v2161 = vadd.f32 0.0, %v2160
        %v2162 = vpop.f32.mrf.mxu0
        %v2163 = vpop.f32.mrf.mxu0
        %v2164 = vadd.f32 0.0, %v2163
        %v2165 = vpop.f32.mrf.mxu0
        %2166 = vmatprep.mubr.bf16.mxu0 0
        %2167 = vmatmul.mubr.bf16.gmra.mxu0 %v2118
        %v2168 = vpop.f32.mrf.mxu0
        %v2169 = vadd.f32 0.0, %v2168
        %v2170 = vpop.f32.mrf.mxu0
        %v2171 = vpop.f32.mrf.mxu0
        %v2172 = vadd.f32 0.0, %v2171
        %v2173 = vpop.f32.mrf.mxu0
        %2174 = vmatprep.mubr.bf16.mxu0 0
        %2175 = vmatmul.mubr.bf16.gmra.mxu0 %v2121
        %v2176 = vpop.f32.mrf.mxu0
        %v2177 = vadd.f32 0.0, %v2176
        %v2178 = vpop.f32.mrf.mxu0
        %v2179 = vpop.f32.mrf.mxu0
        %v2180 = vadd.f32 0.0, %v2179
        %v2181 = vpop.f32.mrf.mxu0
        %2182 = vdwg.mxu0
        %v2183 = vld [vmem:[%s7] sm:$0xff]
        %v2184 = vld [vmem:[%s7 + $0x8] sm:$0xff]
        %v2185 = vld [vmem:[%s7 + $0x10] sm:$0xff]
        %v2186 = vld [vmem:[%s7 + $0x18] sm:$0xff]
        %v2187 = vld [vmem:[%s7 + $0x20] sm:$0xff]
        %v2188 = vld [vmem:[%s7 + $0x28] sm:$0xff]
        %2190 = vset.pattern.permute.xlu0 0
        %2191 = vperm.xlu0 %2190, %v2183
        %v2192 = vpop.permute.xlu0 %2191
        %2195 = vset.pattern.permute.xlu0 0
        %2196 = vperm.xlu0 %2195, %v2184
        %v2197 = vpop.permute.xlu0 %2196
        %2200 = vset.pattern.permute.xlu0 0
        %2201 = vperm.xlu0 %2200, %v2185
        %v2202 = vpop.permute.xlu0 %2201
        %2205 = vset.pattern.permute.xlu0 0
        %2206 = vperm.xlu0 %2205, %v2186
        %v2207 = vpop.permute.xlu0 %2206
        %2210 = vset.pattern.permute.xlu0 0
        %2211 = vperm.xlu0 %2210, %v2187
        %v2212 = vpop.permute.xlu0 %2211
        %2215 = vset.pattern.permute.xlu0 0
        %2216 = vperm.xlu0 %2215, %v2188
        %v2217 = vpop.permute.xlu0 %2216
        %v2219 = vmul.f32 %v2161, %v2192
        %v2220 = vmul.f32 %v2164, %v2197
        %v2221 = vmul.f32 %v2169, %v2202
        %v2222 = vmul.f32 %v2172, %v2207
        %v2223 = vmul.f32 %v2177, %v2212
        %v2224 = vmul.f32 %v2180, %v2217
        %2225 = vst [vmem:[%s605] sm:$0xff] %v2219
        %2226 = vst [vmem:[%s605 + $0x8] sm:$0xff] %v2220
        %2227 = vst [vmem:[%s605 + $0x10] sm:$0xff] %v2221
        %2228 = vst [vmem:[%s605 + $0x18] sm:$0xff] %v2222
        %2229 = vst [vmem:[%s605 + $0x20] sm:$0xff] %v2223
        %2230 = vst [vmem:[%s605 + $0x28] sm:$0xff] %v2224
        %2231 = vst [vmem:[%s612] sm:$0xff] %v2087
        %2232 = vst [vmem:[%s612 + $0x8] sm:$0xff] %v2088
        %2233 = vst [vmem:[%s612 + $0x10] sm:$0xff] %v2089
        %2234 = vst [vmem:[%s612 + $0x18] sm:$0xff] %v2090
        %2235 = vst [vmem:[%s612 + $0x20] sm:$0xff] %v2091
        %s2236 = sand.u32 %s384, 1
        %s2237 = scalar_lea.sflag [#allocation6], %s2236
        %s2238 = sand.u32 %s384, 1
        %s2239 = smul.addr %s2238, 48
        %s2240 = scalar_lea.vmem [#allocation5], %s2239
        %s2241 = sand.u32 %s410, 1
        %s2242 = scalar_lea.sflag [#allocation8], %s2241
        %s2243 = sand.u32 %s410, 1
        %s2244 = smul.addr %s2243, 40
        %s2245 = scalar_lea.vmem [#allocation7], %s2244
        // Predicated region
        $region123: #{tpu_custom_call.1} parent=117 // pred_check
          %p2246 = pneg %p394
        $region124: #{tpu_custom_call.1} parent=117 // pred_check_branch
          %2248 = sbr.rel (%p2246) target = $region126
        $region125: #{tpu_custom_call.1} parent=117 // pred_region
          %s2250 = ssub.s32 768, 768
          %2251 = vsyncadd %s2237, %s2250
          %s2252 = smul.addr %s35, 128
          %s2253 = scalar_lea.hbm %s16, %s2252
          %s2254 = sshll.u32 %s2240, 4
          %s2255 = int_to_ptr.vmem [resolvable:$true] %s2254
          %2260 = dma.vmem_to_hbm [thread:$0]  %s2255, 768, %s2253, %s2237, 128, 256, 8
        $region126: #{tpu_custom_call.1} parent=117 // pred_fallthru
          _
        // Predicated region
        $region127: #{tpu_custom_call.1} parent=117 // pred_check
          %p2261 = pneg %p420
        $region128: #{tpu_custom_call.1} parent=117 // pred_check_branch
          %2263 = sbr.rel (%p2261) target = $region130
        $region129: #{tpu_custom_call.1} parent=117 // pred_region
          %s2265 = ssub.s32 640, 640
          %2266 = vsyncadd %s2242, %s2265
          %s2267 = smul.addr %s35, 128
          %s2268 = scalar_lea.hbm %s17, %s2267
          %s2269 = sshll.u32 %s2245, 4
          %s2270 = int_to_ptr.vmem [resolvable:$true] %s2269
          %2275 = dma.vmem_to_hbm [thread:$0]  %s2270, 640, %s2268, %s2242, 128, 256, 8
        $region130: #{tpu_custom_call.1} parent=117 // pred_fallthru
          _
      $region118: #{tpu_custom_call.1} parent=5 // pred_fallthru
        _
      %p2276 = scmp.le.s32.totalorder 2, %s30
      // Predicated region
      $region131: #{tpu_custom_call.1} parent=5 // pred_check
        %p2277 = pneg %p2276
      $region132: #{tpu_custom_call.1} parent=5 // pred_check_branch
        %2279 = sbr.rel (%p2277) target = $region134
      $region133: #{tpu_custom_call.1} parent=5 // pred_region
        %s2280 = ssub.s32 %s30, 2
        // Predicated region
        $region135: #{tpu_custom_call.1} parent=133 // pred_check
          %p2281 = pneg %p400
        $region136: #{tpu_custom_call.1} parent=133 // pred_check_branch
          %2283 = sbr.rel (%p2281) target = $region138
        $region137: #{tpu_custom_call.1} parent=133 // pred_region
          %s2284 = sand.u32 %s385, 1
          %s2285 = scalar_lea.sflag [#allocation6], %s2284
          %s2286 = sand.u32 %s385, 1
          %s2287 = smul.addr %s2286, 48
          %s2288 = scalar_lea.vmem [#allocation5], %s2287
          %2289 = dma.done %s2285, 768
        $region138: #{tpu_custom_call.1} parent=133 // pred_fallthru
          _
        // Predicated region
        $region139: #{tpu_custom_call.1} parent=133 // pred_check
          %p2290 = pneg %p426
        $region140: #{tpu_custom_call.1} parent=133 // pred_check_branch
          %2292 = sbr.rel (%p2290) target = $region142
        $region141: #{tpu_custom_call.1} parent=133 // pred_region
          %s2293 = sand.u32 %s411, 1
          %s2294 = scalar_lea.sflag [#allocation8], %s2293
          %s2295 = sand.u32 %s411, 1
          %s2296 = smul.addr %s2295, 40
          %s2297 = scalar_lea.vmem [#allocation7], %s2296
          %2298 = dma.done %s2294, 640
        $region142: #{tpu_custom_call.1} parent=133 // pred_fallthru
          _
      $region134: #{tpu_custom_call.1} parent=5 // pred_fallthru
        _
    $region6: #{tpu_custom_call.1} parent=1 // loop_footer
      %s34 = sadd.s32 1, %s30
    $region7: #{tpu_custom_call.1} parent=1 // loop_footer_branch
      %29 = sbr.rel target = $region3
    $region8: #{tpu_custom_call.1} parent=1 // loop_exit
      _
    %2299 = vsyncpa [#allocation6], 1
    %s2300 = scalar_lea.sflag [#allocation6], 1
    %2301 = vsyncpa %s2300, 1
    %2302 = vsyncpa [#allocation8], 1
    %s2303 = scalar_lea.sflag [#allocation8], 1
    %2304 = vsyncpa %s2303, 1

</llo_original>
